<compile_context>
chip_gen: v6e
topology: v6e:2x2x1
jax: 0.10.0
libtpu: 0.0.40
codegen_flags: <defaults>
</compile_context>

<pallas_src>
import math

import numpy as np
import jax
import jax.numpy as jnp
from jax.experimental import pallas as pl
from jax.experimental.pallas import tpu as pltpu

# ---- model hyper-parameters (small, consistent with the module) ----
HIDDEN = 32            # hidden_size / embed_dim (c)
HEADS = 2              # num_heads
HEAD_DIM = HIDDEN // HEADS
KERNEL = 9             # ffn conv kernel_size (FastSpeech default), padding='SAME'
FILTER = 4 * HIDDEN    # ffn filter_size
EPS = 1e-12            # LayerNorm eps used by the module
SEQ = 16               # T
BATCH = 2              # B
BT = BATCH * SEQ       # rows of the stacked [T*B, C] activation tile (time-major)
MXU_DTYPE = jnp.bfloat16   # MXU operand dtype; accumulation stays float32
NEG_INF = -1e9


def _layer_norm(x, g, b):
    mu = jnp.mean(x, axis=-1, keepdims=True)
    var = jnp.mean(jnp.square(x - mu), axis=-1, keepdims=True)
    return (x - mu) * jax.lax.rsqrt(var + EPS) * g + b


def _gelu_tanh(x):
    # TODO(synk): F.gelu default is the exact erf form; the tanh approximation
    # (pointwise deviation ~1e-3) is used so the transcendental lands on the
    # EUP slot instead of a ~15-op VALU polynomial. Covered by the 3e-2 check.
    c = math.sqrt(2.0 / math.pi)
    return 0.5 * x * (1.0 + jnp.tanh(c * (x + 0.044715 * x * x * x)))


def encoder_layer_kernel(x_ref, keep_ref, bias_ref,
                         ln1_g_ref, ln1_b_ref,
                         wq_ref, wk_ref, wvo_ref,
                         ln2_g_ref, ln2_b_ref,
                         shift_ref, convw_ref, convb_ref,
                         w2_ref, b2_ref, o_ref):
    """Single grid step: whole batch resident in VMEM as a time-major [T*B, C] tile."""
    f32 = jnp.float32
    x = x_ref[...]                        # [BT, C] f32
    keep = keep_ref[...]                  # [BT, 1]  1 - padding (per row)
    bias = bias_ref[...]                  # [BT, BT] additive attention bias (0 / -1e9)

    # ---------------- layer_norm1 + multi-head self-attention ----------------
    # wq_ref[h]: per-head q projection, head_dim**-0.5 folded, zeros outside
    # this head's output columns.  wvo_ref[h]: (per-head v proj) @ out_proj,
    # so summing head contexts over heads IS the concat + output projection.
    h = _layer_norm(x, ln1_g_ref[...], ln1_b_ref[...])
    h_bf = h.astype(MXU_DTYPE)
    k = jnp.dot(h_bf, wk_ref[...], preferred_element_type=f32)       # [BT, C]
    k_bf = k.astype(MXU_DTYPE)

    attn = jnp.zeros((BT, HIDDEN), f32)
    for hh in range(HEADS):
        qh = jnp.dot(h_bf, wq_ref[hh], preferred_element_type=f32)   # [BT, C]
        s = jax.lax.dot_general(qh.astype(MXU_DTYPE), k_bf,
                                (((1,), (1,)), ((), ())),
                                preferred_element_type=f32)          # [BT, BT]
        s = s + bias
        m = jnp.max(s, axis=-1, keepdims=True)
        e = jnp.exp(s - m)
        p = e * pl.reciprocal(jnp.sum(e, axis=-1, keepdims=True), approx=True)
        vo = jnp.dot(h_bf, wvo_ref[hh], preferred_element_type=f32)  # [BT, C]
        attn = attn + jnp.dot(p.astype(MXU_DTYPE), vo.astype(MXU_DTYPE),
                              preferred_element_type=f32)

    x1 = (x + attn) * keep                                           # residual + mask

    # ---------------- layer_norm2 + conv FFN (9 accumulated matmuls) ----------
    # Tap kk contribution = ShiftMat_kk @ h2 @ W_kk.  The static 0/1 shift
    # matrices realise both the time shift and the per-sequence 'SAME' zero
    # padding, so no in-kernel masking / concat / unaligned slices are needed.
    h2 = _layer_norm(x1, ln2_g_ref[...], ln2_b_ref[...])
    h2_bf = h2.astype(MXU_DTYPE)
    y = jnp.zeros((BT, FILTER), f32)
    for kk in range(KERNEL):
        sh = jnp.dot(shift_ref[kk], h2_bf, preferred_element_type=f32)   # [BT, C]
        y = y + jnp.dot(sh.astype(MXU_DTYPE), convw_ref[kk],
                        preferred_element_type=f32)
    y = _gelu_tanh(y + convb_ref[...])
    out = jnp.dot(y.astype(MXU_DTYPE), w2_ref[...],
                  preferred_element_type=f32) + b2_ref[...]

    o_ref[...] = ((x1 + out) * keep).astype(o_ref.dtype)


def prepare_params(params):
    """One-time parameter preparation (weight folding, casts, static conv shifts)."""
    ln1_g, ln1_b, wqkv, wout, ln2_g, ln2_b, convw, convb, w2, b2 = params
    C = HIDDEN

    wq_t = wqkv[:C].T * (HEAD_DIM ** -0.5)       # [C, C], q scale folded
    wk_t = wqkv[C:2 * C].T                       # [C, C]
    wv_t = wqkv[2 * C:].T                        # [C, C]
    wout_t = wout.T                              # [C, C]

    col_head = jnp.arange(C) // HEAD_DIM         # head id of each output column
    wq_heads, wvo_heads = [], []
    for hh in range(HEADS):
        sel = (col_head == hh)[None, :]
        wq_heads.append(jnp.where(sel, wq_t, 0.0))
        wvo_heads.append(jnp.where(sel, wv_t, 0.0) @ wout_t)   # fold out_proj
    wq_heads = jnp.stack(wq_heads).astype(MXU_DTYPE)           # [H, C, C]
    wvo_heads = jnp.stack(wvo_heads).astype(MXU_DTYPE)         # [H, C, C]
    wk_bf = wk_t.astype(MXU_DTYPE)

    scale_conv = KERNEL ** -0.5
    convw_taps = (jnp.transpose(convw, (2, 1, 0)) * scale_conv).astype(MXU_DTYPE)  # [K, C, F]
    convb_s = (convb * scale_conv).reshape(1, FILTER).astype(jnp.float32)
    w2_bf = w2.T.astype(MXU_DTYPE)                                                 # [F, C]

    # Static conv shift/boundary matrices (time-major stacked rows: r = t*B + b).
    pad = KERNEL // 2
    sm = np.zeros((KERNEL, BT, BT), np.float32)
    for kk in range(KERNEL):
        d = kk - pad
        for t in range(SEQ):
            ts = t + d
            if 0 <= ts < SEQ:
                for b in range(BATCH):
                    sm[kk, t * BATCH + b, ts * BATCH + b] = 1.0
    shift_mats = jnp.asarray(sm).astype(MXU_DTYPE)              # [K, BT, BT], exact 0/1

    return (ln1_g.reshape(1, C).astype(jnp.float32),
            ln1_b.reshape(1, C).astype(jnp.float32),
            wq_heads, wk_bf, wvo_heads,
            ln2_g.reshape(1, C).astype(jnp.float32),
            ln2_b.reshape(1, C).astype(jnp.float32),
            shift_mats, convw_taps, convb_s, w2_bf,
            b2.reshape(1, C).astype(jnp.float32))


def transformer_encoder_layer(x_tbc, padding_mask, prep):
    """x_tbc: [T, B, C] float32; padding_mask: [B, T] (1 = pad). Returns [T, B, C]."""
    T, B, C = x_tbc.shape
    BTv = T * B
    (ln1_g, ln1_b, wq_heads, wk_bf, wvo_heads, ln2_g, ln2_b,
     shift_mats, convw_taps, convb_s, w2_bf, b2) = prep

    # ---- glue (per call): free time-major reshape + tiny mask prep only ----
    x = x_tbc.reshape(BTv, C)                                      # row r = t*B + b
    pad_rows = jnp.transpose(padding_mask.astype(jnp.float32)).reshape(BTv)
    keep = (1.0 - pad_rows)[:, None]                               # [BT, 1]
    bidx = jnp.arange(BTv, dtype=jnp.int32) % B
    same = bidx[:, None] == bidx[None, :]
    bias = jnp.where(jnp.logical_and(same, pad_rows[None, :] < 0.5),
                     0.0, NEG_INF).astype(jnp.float32)             # [BT, BT] additive

    def full(shape):
        n = len(shape)
        return pl.BlockSpec(shape, lambda i, n=n: (0,) * n)

    grid_spec = pltpu.PrefetchScalarGridSpec(
        num_scalar_prefetch=0,
        grid=(1,),                                                 # whole batch, one step
        in_specs=[
            full((BTv, C)),                    # x (time-major stacked)
            full((BTv, 1)),                    # keep
            full((BTv, BTv)),                  # additive attention bias
            full((1, C)), full((1, C)),        # ln1 gamma / beta
            full((HEADS, C, C)),               # per-head q proj (scaled, masked)
            full((C, C)),                      # k proj
            full((HEADS, C, C)),               # per-head v proj @ out proj
            full((1, C)), full((1, C)),        # ln2 gamma / beta
            full((KERNEL, BTv, BTv)),          # static conv shift matrices
            full((KERNEL, C, FILTER)),         # per-tap conv weights (scaled)
            full((1, FILTER)),                 # conv bias (pre-scaled)
            full((FILTER, C)), full((1, C)),   # ffn_2 w / b
        ],
        out_specs=full((BTv, C)),
    )
    out = pl.pallas_call(
        encoder_layer_kernel,
        out_shape=jax.ShapeDtypeStruct((BTv, C), jnp.float32),
        grid_spec=grid_spec,
        compiler_params=pltpu.CompilerParams(
            dimension_semantics=("arbitrary",)),
    )(x, keep, bias,
      ln1_g, ln1_b, wq_heads, wk_bf, wvo_heads,
      ln2_g, ln2_b, shift_mats, convw_taps, convb_s, w2_bf, b2)
    return out.reshape(T, B, C)                                    # free reshape back


def reference_forward(x_tbc, mask, params):
    """Pure-JAX (float32) reference replicating the PyTorch forward (eval mode)."""
    ln1_g, ln1_b, wqkv, wout, ln2_g, ln2_b, convw, convb, w2, b2 = params
    T, B, C = x_tbc.shape

    def ln(v, g, b):
        mu = v.mean(-1, keepdims=True)
        var = ((v - mu) ** 2).mean(-1, keepdims=True)
        return (v - mu) / jnp.sqrt(var + EPS) * g + b

    x = x_tbc
    h = ln(x, ln1_g, ln1_b)
    qkv = jnp.einsum('tbc,dc->tbd', h, wqkv)
    q, k, v = jnp.split(qkv, 3, axis=-1)
    q = q * (HEAD_DIM ** -0.5)
    qh = q.reshape(T, B, HEADS, HEAD_DIM)
    kh = k.reshape(T, B, HEADS, HEAD_DIM)
    vh = v.reshape(T, B, HEADS, HEAD_DIM)
    s = jnp.einsum('tbhd,sbhd->bhts', qh, kh)
    s = jnp.where(mask[:, None, None, :] > 0.5, NEG_INF, s)
    p = jax.nn.softmax(s, axis=-1)
    a = jnp.einsum('bhts,sbhd->tbhd', p, vh).reshape(T, B, C)
    a = jnp.einsum('tbc,dc->tbd', a, wout)
    keepm = (1.0 - mask).T[:, :, None]                               # [T, B, 1]
    x1 = (x + a) * keepm

    h2 = ln(x1, ln2_g, ln2_b)
    inp = jnp.transpose(h2, (1, 2, 0))                               # [B, C, T]
    y = jax.lax.conv_general_dilated(
        inp, convw, (1,), [(KERNEL // 2, KERNEL // 2)],
        dimension_numbers=('NCH', 'OIH', 'NCH'))
    y = y + convb[None, :, None]
    y = jnp.transpose(y, (2, 0, 1))                                  # [T, B, F]
    y = y * (KERNEL ** -0.5)
    y = jax.nn.gelu(y, approximate=False)
    out = jnp.einsum('tbf,cf->tbc', y, w2) + b2
    return (x1 + out) * keepm


def make_params(key):
    ks = jax.random.split(key, 6)
    ln1_g = jnp.ones((HIDDEN,), jnp.float32)
    ln1_b = jnp.zeros((HIDDEN,), jnp.float32)
    ln2_g = jnp.ones((HIDDEN,), jnp.float32)
    ln2_b = jnp.zeros((HIDDEN,), jnp.float32)
    wqkv = jax.random.normal(ks[0], (3 * HIDDEN, HIDDEN), jnp.float32) / math.sqrt(HIDDEN)
    wout = jax.random.normal(ks[1], (HIDDEN, HIDDEN), jnp.float32) / math.sqrt(HIDDEN)
    convw = jax.random.normal(ks[2], (FILTER, HIDDEN, KERNEL), jnp.float32) / math.sqrt(HIDDEN * KERNEL)
    convb = 0.01 * jax.random.normal(ks[3], (FILTER,), jnp.float32)
    w2 = jax.random.normal(ks[4], (HIDDEN, FILTER), jnp.float32) / math.sqrt(FILTER)
    b2 = 0.01 * jax.random.normal(ks[5], (HIDDEN,), jnp.float32)
    return (ln1_g, ln1_b, wqkv, wout, ln2_g, ln2_b, convw, convb, w2, b2)


if __name__ == "__main__":
    key = jax.random.PRNGKey(0)
    kx, kp = jax.random.split(key)
    params = make_params(kp)

    x = jax.random.normal(kx, (SEQ, BATCH, HIDDEN), jnp.float32)     # [T, B, C]
    mask = jnp.zeros((BATCH, SEQ), jnp.float32)
    mask = mask.at[0, -4:].set(1.0)                                  # pad tail of batch 0

    prep = jax.block_until_ready(prepare_params(params))             # one-time folding

    y = transformer_encoder_layer(x, mask, prep)
    y = jax.block_until_ready(y)

    y_ref = jax.block_until_ready(reference_forward(x, mask, params))
    err = float(jnp.max(jnp.abs(y - y_ref)))
    assert y.shape == (SEQ, BATCH, HIDDEN), y.shape
    # bf16 MXU operands (f32 accumulation) + approximate EUP reciprocals +
    # tanh-approximate GELU vs. the pure-f32 exact-erf reference: expected
    # max-abs deviation ~1e-2, so check against a 3e-2 bound.
    assert err < 3e-2, f"max abs error {err}"
    print("KERNEL_OK")
</pallas_src>

<mosaic_0001>
module attributes {stable_mosaic.version = 11 : i64} {
  func.func @encoder_layer_kernel(%arg0: i32, %arg1: memref<32x32xf32, #tpu.memory_space<vmem>>, %arg2: memref<32x1xf32, #tpu.memory_space<vmem>>, %arg3: memref<32x32xf32, #tpu.memory_space<vmem>>, %arg4: memref<1x32xf32, #tpu.memory_space<vmem>>, %arg5: memref<1x32xf32, #tpu.memory_space<vmem>>, %arg6: memref<2x32x32xbf16, #tpu.memory_space<vmem>>, %arg7: memref<32x32xbf16, #tpu.memory_space<vmem>>, %arg8: memref<2x32x32xbf16, #tpu.memory_space<vmem>>, %arg9: memref<1x32xf32, #tpu.memory_space<vmem>>, %arg10: memref<1x32xf32, #tpu.memory_space<vmem>>, %arg11: memref<9x32x32xbf16, #tpu.memory_space<vmem>>, %arg12: memref<9x32x128xbf16, #tpu.memory_space<vmem>>, %arg13: memref<1x128xf32, #tpu.memory_space<vmem>>, %arg14: memref<128x32xbf16, #tpu.memory_space<vmem>>, %arg15: memref<1x32xf32, #tpu.memory_space<vmem>>, %arg16: memref<32x32xf32, #tpu.memory_space<vmem>>) attributes {dimension_semantics = [#tpu.dimension_semantics<arbitrary>], iteration_bounds = array<i64: 1>, scalar_prefetch = 0 : i64, scratch_operands = 0 : i64, tpu.core_type = #tpu.core_type<tc>, window_params = [{pipeline_mode = #tpu.pipeline_mode<synchronous>, transform_indices = @transform_0, window_bounds = array<i64: 32, 32>}, {pipeline_mode = #tpu.pipeline_mode<synchronous>, transform_indices = @transform_1, window_bounds = array<i64: 32, 1>}, {pipeline_mode = #tpu.pipeline_mode<synchronous>, transform_indices = @transform_2, window_bounds = array<i64: 32, 32>}, {pipeline_mode = #tpu.pipeline_mode<synchronous>, transform_indices = @transform_3, window_bounds = array<i64: 1, 32>}, {pipeline_mode = #tpu.pipeline_mode<synchronous>, transform_indices = @transform_4, window_bounds = array<i64: 1, 32>}, {pipeline_mode = #tpu.pipeline_mode<synchronous>, transform_indices = @transform_5, window_bounds = array<i64: 2, 32, 32>}, {pipeline_mode = #tpu.pipeline_mode<synchronous>, transform_indices = @transform_6, window_bounds = array<i64: 32, 32>}, {pipeline_mode = #tpu.pipeline_mode<synchronous>, transform_indices = @transform_7, window_bounds = array<i64: 2, 32, 32>}, {pipeline_mode = #tpu.pipeline_mode<synchronous>, transform_indices = @transform_8, window_bounds = array<i64: 1, 32>}, {pipeline_mode = #tpu.pipeline_mode<synchronous>, transform_indices = @transform_9, window_bounds = array<i64: 1, 32>}, {pipeline_mode = #tpu.pipeline_mode<synchronous>, transform_indices = @transform_10, window_bounds = array<i64: 9, 32, 32>}, {pipeline_mode = #tpu.pipeline_mode<synchronous>, transform_indices = @transform_11, window_bounds = array<i64: 9, 32, 128>}, {pipeline_mode = #tpu.pipeline_mode<synchronous>, transform_indices = @transform_12, window_bounds = array<i64: 1, 128>}, {pipeline_mode = #tpu.pipeline_mode<synchronous>, transform_indices = @transform_13, window_bounds = array<i64: 128, 32>}, {pipeline_mode = #tpu.pipeline_mode<synchronous>, transform_indices = @transform_14, window_bounds = array<i64: 1, 32>}, {pipeline_mode = #tpu.pipeline_mode<synchronous>, transform_indices = @transform_15, window_bounds = array<i64: 32, 32>}]} {
    %c0 = arith.constant 0 : index
    %c0_0 = arith.constant 0 : index
    %0 = vector.load %arg1[%c0, %c0_0] : memref<32x32xf32, #tpu.memory_space<vmem>>, vector<32x32xf32>
    %c0_1 = arith.constant 0 : index
    %c0_2 = arith.constant 0 : index
    %1 = vector.load %arg2[%c0_1, %c0_2] : memref<32x1xf32, #tpu.memory_space<vmem>>, vector<32x1xf32>
    %c0_3 = arith.constant 0 : index
    %c0_4 = arith.constant 0 : index
    %2 = vector.load %arg3[%c0_3, %c0_4] : memref<32x32xf32, #tpu.memory_space<vmem>>, vector<32x32xf32>
    %c0_5 = arith.constant 0 : index
    %c0_6 = arith.constant 0 : index
    %3 = vector.load %arg4[%c0_5, %c0_6] : memref<1x32xf32, #tpu.memory_space<vmem>>, vector<1x32xf32>
    %c0_7 = arith.constant 0 : index
    %c0_8 = arith.constant 0 : index
    %4 = vector.load %arg5[%c0_7, %c0_8] : memref<1x32xf32, #tpu.memory_space<vmem>>, vector<1x32xf32>
    %cst = arith.constant dense<0.000000e+00> : vector<32xf32>
    %5 = vector.multi_reduction <add>, %0, %cst [1] : vector<32x32xf32> to vector<32xf32>
    %6 = vector.shape_cast %5 : vector<32xf32> to vector<32x1xf32>
    %cst_9 = arith.constant 3.200000e+01 : f32
    %7 = vector.broadcast %cst_9 : f32 to vector<32x1xf32>
    %8 = arith.divf %6, %7 : vector<32x1xf32>
    %9 = vector.broadcast %8 : vector<32x1xf32> to vector<32x32xf32>
    %10 = arith.subf %0, %9 : vector<32x32xf32>
    %11 = arith.mulf %10, %10 : vector<32x32xf32>
    %cst_10 = arith.constant dense<0.000000e+00> : vector<32xf32>
    %12 = vector.multi_reduction <add>, %11, %cst_10 [1] : vector<32x32xf32> to vector<32xf32>
    %13 = vector.shape_cast %12 : vector<32xf32> to vector<32x1xf32>
    %cst_11 = arith.constant 3.200000e+01 : f32
    %14 = vector.broadcast %cst_11 : f32 to vector<32x1xf32>
    %15 = arith.divf %13, %14 : vector<32x1xf32>
    %16 = vector.broadcast %8 : vector<32x1xf32> to vector<32x32xf32>
    %17 = arith.subf %0, %16 : vector<32x32xf32>
    %cst_12 = arith.constant 9.99999996E-13 : f32
    %18 = vector.broadcast %cst_12 : f32 to vector<32x1xf32>
    %19 = arith.addf %15, %18 : vector<32x1xf32>
    %20 = math.rsqrt %19 : vector<32x1xf32>
    %21 = vector.broadcast %20 : vector<32x1xf32> to vector<32x32xf32>
    %22 = arith.mulf %17, %21 : vector<32x32xf32>
    %23 = vector.broadcast %3 : vector<1x32xf32> to vector<32x32xf32>
    %24 = arith.mulf %22, %23 : vector<32x32xf32>
    %25 = vector.broadcast %4 : vector<1x32xf32> to vector<32x32xf32>
    %26 = arith.addf %24, %25 : vector<32x32xf32>
    %27 = arith.truncf %26 : vector<32x32xf32> to vector<32x32xbf16>
    %c0_13 = arith.constant 0 : index
    %c0_14 = arith.constant 0 : index
    %28 = vector.load %arg7[%c0_13, %c0_14] : memref<32x32xbf16, #tpu.memory_space<vmem>>, vector<32x32xbf16>
    %cst_15 = arith.constant dense<0.000000e+00> : vector<32x32xf32>
    %29 = tpu.matmul %27, %28, %cst_15 {dimension_numbers = #tpu.dot_dimension_numbers<[1], [0], [0], [1], [0, 0, 1, 1], [], []>} : vector<32x32xbf16>, vector<32x32xbf16>, vector<32x32xf32> -> vector<32x32xf32>
    %30 = arith.truncf %29 : vector<32x32xf32> to vector<32x32xbf16>
    %cst_16 = arith.constant 0.000000e+00 : f32
    %31 = vector.broadcast %cst_16 : f32 to vector<32x32xf32>
    %c0_17 = arith.constant 0 : index
    %c0_18 = arith.constant 0 : index
    %c0_19 = arith.constant 0 : index
    %32 = vector.load %arg6[%c0_17, %c0_18, %c0_19] : memref<2x32x32xbf16, #tpu.memory_space<vmem>>, vector<1x32x32xbf16>
    %33 = vector.shape_cast %32 : vector<1x32x32xbf16> to vector<32x32xbf16>
    %cst_20 = arith.constant dense<0.000000e+00> : vector<32x32xf32>
    %34 = tpu.matmul %27, %33, %cst_20 {dimension_numbers = #tpu.dot_dimension_numbers<[1], [0], [0], [1], [0, 0, 1, 1], [], []>} : vector<32x32xbf16>, vector<32x32xbf16>, vector<32x32xf32> -> vector<32x32xf32>
    %35 = arith.truncf %34 : vector<32x32xf32> to vector<32x32xbf16>
    %cst_21 = arith.constant dense<0.000000e+00> : vector<32x32xf32>
    %36 = tpu.matmul %35, %30, %cst_21 {dimension_numbers = #tpu.dot_dimension_numbers<[1], [1], [0], [0], [0, 0, 1, 0], [], []>} : vector<32x32xbf16>, vector<32x32xbf16>, vector<32x32xf32> -> vector<32x32xf32>
    %37 = arith.addf %36, %2 : vector<32x32xf32>
    %cst_22 = arith.constant dense<0xFF800000> : vector<32xf32>
    %38 = vector.multi_reduction <maximumf>, %37, %cst_22 [1] : vector<32x32xf32> to vector<32xf32>
    %39 = vector.shape_cast %38 : vector<32xf32> to vector<32x1xf32>
    %40 = vector.broadcast %39 : vector<32x1xf32> to vector<32x32xf32>
    %41 = arith.subf %37, %40 : vector<32x32xf32>
    %42 = math.exp %41 : vector<32x32xf32>
    %cst_23 = arith.constant dense<0.000000e+00> : vector<32xf32>
    %43 = vector.multi_reduction <add>, %42, %cst_23 [1] : vector<32x32xf32> to vector<32xf32>
    %44 = vector.shape_cast %43 : vector<32xf32> to vector<32x1xf32>
    %45 = tpu.reciprocal %44 {approx = true} : vector<32x1xf32> -> vector<32x1xf32>
    %46 = vector.broadcast %45 : vector<32x1xf32> to vector<32x32xf32>
    %47 = arith.mulf %42, %46 : vector<32x32xf32>
    %c0_24 = arith.constant 0 : index
    %c0_25 = arith.constant 0 : index
    %c0_26 = arith.constant 0 : index
    %48 = vector.load %arg8[%c0_24, %c0_25, %c0_26] : memref<2x32x32xbf16, #tpu.memory_space<vmem>>, vector<1x32x32xbf16>
    %49 = vector.shape_cast %48 : vector<1x32x32xbf16> to vector<32x32xbf16>
    %cst_27 = arith.constant dense<0.000000e+00> : vector<32x32xf32>
    %50 = tpu.matmul %27, %49, %cst_27 {dimension_numbers = #tpu.dot_dimension_numbers<[1], [0], [0], [1], [0, 0, 1, 1], [], []>} : vector<32x32xbf16>, vector<32x32xbf16>, vector<32x32xf32> -> vector<32x32xf32>
    %51 = arith.truncf %47 : vector<32x32xf32> to vector<32x32xbf16>
    %52 = arith.truncf %50 : vector<32x32xf32> to vector<32x32xbf16>
    %cst_28 = arith.constant dense<0.000000e+00> : vector<32x32xf32>
    %53 = tpu.matmul %51, %52, %cst_28 {dimension_numbers = #tpu.dot_dimension_numbers<[1], [0], [0], [1], [0, 0, 1, 1], [], []>} : vector<32x32xbf16>, vector<32x32xbf16>, vector<32x32xf32> -> vector<32x32xf32>
    %54 = arith.addf %31, %53 : vector<32x32xf32>
    %c1 = arith.constant 1 : index
    %c0_29 = arith.constant 0 : index
    %c0_30 = arith.constant 0 : index
    %55 = vector.load %arg6[%c1, %c0_29, %c0_30] : memref<2x32x32xbf16, #tpu.memory_space<vmem>>, vector<1x32x32xbf16>
    %56 = vector.shape_cast %55 : vector<1x32x32xbf16> to vector<32x32xbf16>
    %cst_31 = arith.constant dense<0.000000e+00> : vector<32x32xf32>
    %57 = tpu.matmul %27, %56, %cst_31 {dimension_numbers = #tpu.dot_dimension_numbers<[1], [0], [0], [1], [0, 0, 1, 1], [], []>} : vector<32x32xbf16>, vector<32x32xbf16>, vector<32x32xf32> -> vector<32x32xf32>
    %58 = arith.truncf %57 : vector<32x32xf32> to vector<32x32xbf16>
    %cst_32 = arith.constant dense<0.000000e+00> : vector<32x32xf32>
    %59 = tpu.matmul %58, %30, %cst_32 {dimension_numbers = #tpu.dot_dimension_numbers<[1], [1], [0], [0], [0, 0, 1, 0], [], []>} : vector<32x32xbf16>, vector<32x32xbf16>, vector<32x32xf32> -> vector<32x32xf32>
    %60 = arith.addf %59, %2 : vector<32x32xf32>
    %cst_33 = arith.constant dense<0xFF800000> : vector<32xf32>
    %61 = vector.multi_reduction <maximumf>, %60, %cst_33 [1] : vector<32x32xf32> to vector<32xf32>
    %62 = vector.shape_cast %61 : vector<32xf32> to vector<32x1xf32>
    %63 = vector.broadcast %62 : vector<32x1xf32> to vector<32x32xf32>
    %64 = arith.subf %60, %63 : vector<32x32xf32>
    %65 = math.exp %64 : vector<32x32xf32>
    %cst_34 = arith.constant dense<0.000000e+00> : vector<32xf32>
    %66 = vector.multi_reduction <add>, %65, %cst_34 [1] : vector<32x32xf32> to vector<32xf32>
    %67 = vector.shape_cast %66 : vector<32xf32> to vector<32x1xf32>
    %68 = tpu.reciprocal %67 {approx = true} : vector<32x1xf32> -> vector<32x1xf32>
    %69 = vector.broadcast %68 : vector<32x1xf32> to vector<32x32xf32>
    %70 = arith.mulf %65, %69 : vector<32x32xf32>
    %c1_35 = arith.constant 1 : index
    %c0_36 = arith.constant 0 : index
    %c0_37 = arith.constant 0 : index
    %71 = vector.load %arg8[%c1_35, %c0_36, %c0_37] : memref<2x32x32xbf16, #tpu.memory_space<vmem>>, vector<1x32x32xbf16>
    %72 = vector.shape_cast %71 : vector<1x32x32xbf16> to vector<32x32xbf16>
    %cst_38 = arith.constant dense<0.000000e+00> : vector<32x32xf32>
    %73 = tpu.matmul %27, %72, %cst_38 {dimension_numbers = #tpu.dot_dimension_numbers<[1], [0], [0], [1], [0, 0, 1, 1], [], []>} : vector<32x32xbf16>, vector<32x32xbf16>, vector<32x32xf32> -> vector<32x32xf32>
    %74 = arith.truncf %70 : vector<32x32xf32> to vector<32x32xbf16>
    %75 = arith.truncf %73 : vector<32x32xf32> to vector<32x32xbf16>
    %cst_39 = arith.constant dense<0.000000e+00> : vector<32x32xf32>
    %76 = tpu.matmul %74, %75, %cst_39 {dimension_numbers = #tpu.dot_dimension_numbers<[1], [0], [0], [1], [0, 0, 1, 1], [], []>} : vector<32x32xbf16>, vector<32x32xbf16>, vector<32x32xf32> -> vector<32x32xf32>
    %77 = arith.addf %54, %76 : vector<32x32xf32>
    %78 = arith.addf %0, %77 : vector<32x32xf32>
    %79 = vector.broadcast %1 : vector<32x1xf32> to vector<32x32xf32>
    %80 = arith.mulf %78, %79 : vector<32x32xf32>
    %c0_40 = arith.constant 0 : index
    %c0_41 = arith.constant 0 : index
    %81 = vector.load %arg9[%c0_40, %c0_41] : memref<1x32xf32, #tpu.memory_space<vmem>>, vector<1x32xf32>
    %c0_42 = arith.constant 0 : index
    %c0_43 = arith.constant 0 : index
    %82 = vector.load %arg10[%c0_42, %c0_43] : memref<1x32xf32, #tpu.memory_space<vmem>>, vector<1x32xf32>
    %cst_44 = arith.constant dense<0.000000e+00> : vector<32xf32>
    %83 = vector.multi_reduction <add>, %80, %cst_44 [1] : vector<32x32xf32> to vector<32xf32>
    %84 = vector.shape_cast %83 : vector<32xf32> to vector<32x1xf32>
    %cst_45 = arith.constant 3.200000e+01 : f32
    %85 = vector.broadcast %cst_45 : f32 to vector<32x1xf32>
    %86 = arith.divf %84, %85 : vector<32x1xf32>
    %87 = vector.broadcast %86 : vector<32x1xf32> to vector<32x32xf32>
    %88 = arith.subf %80, %87 : vector<32x32xf32>
    %89 = arith.mulf %88, %88 : vector<32x32xf32>
    %cst_46 = arith.constant dense<0.000000e+00> : vector<32xf32>
    %90 = vector.multi_reduction <add>, %89, %cst_46 [1] : vector<32x32xf32> to vector<32xf32>
    %91 = vector.shape_cast %90 : vector<32xf32> to vector<32x1xf32>
    %cst_47 = arith.constant 3.200000e+01 : f32
    %92 = vector.broadcast %cst_47 : f32 to vector<32x1xf32>
    %93 = arith.divf %91, %92 : vector<32x1xf32>
    %94 = vector.broadcast %86 : vector<32x1xf32> to vector<32x32xf32>
    %95 = arith.subf %80, %94 : vector<32x32xf32>
    %cst_48 = arith.constant 9.99999996E-13 : f32
    %96 = vector.broadcast %cst_48 : f32 to vector<32x1xf32>
    %97 = arith.addf %93, %96 : vector<32x1xf32>
    %98 = math.rsqrt %97 : vector<32x1xf32>
    %99 = vector.broadcast %98 : vector<32x1xf32> to vector<32x32xf32>
    %100 = arith.mulf %95, %99 : vector<32x32xf32>
    %101 = vector.broadcast %81 : vector<1x32xf32> to vector<32x32xf32>
    %102 = arith.mulf %100, %101 : vector<32x32xf32>
    %103 = vector.broadcast %82 : vector<1x32xf32> to vector<32x32xf32>
    %104 = arith.addf %102, %103 : vector<32x32xf32>
    %105 = arith.truncf %104 : vector<32x32xf32> to vector<32x32xbf16>
    %cst_49 = arith.constant 0.000000e+00 : f32
    %106 = vector.broadcast %cst_49 : f32 to vector<32x128xf32>
    %c0_50 = arith.constant 0 : index
    %c0_51 = arith.constant 0 : index
    %c0_52 = arith.constant 0 : index
    %107 = vector.load %arg11[%c0_50, %c0_51, %c0_52] : memref<9x32x32xbf16, #tpu.memory_space<vmem>>, vector<1x32x32xbf16>
    %108 = vector.shape_cast %107 : vector<1x32x32xbf16> to vector<32x32xbf16>
    %cst_53 = arith.constant dense<0.000000e+00> : vector<32x32xf32>
    %109 = tpu.matmul %108, %105, %cst_53 {dimension_numbers = #tpu.dot_dimension_numbers<[1], [0], [0], [1], [0, 0, 1, 1], [], []>} : vector<32x32xbf16>, vector<32x32xbf16>, vector<32x32xf32> -> vector<32x32xf32>
    %110 = arith.truncf %109 : vector<32x32xf32> to vector<32x32xbf16>
    %c0_54 = arith.constant 0 : index
    %c0_55 = arith.constant 0 : index
    %c0_56 = arith.constant 0 : index
    %111 = vector.load %arg12[%c0_54, %c0_55, %c0_56] : memref<9x32x128xbf16, #tpu.memory_space<vmem>>, vector<1x32x128xbf16>
    %112 = vector.shape_cast %111 : vector<1x32x128xbf16> to vector<32x128xbf16>
    %cst_57 = arith.constant dense<0.000000e+00> : vector<32x128xf32>
    %113 = tpu.matmul %110, %112, %cst_57 {dimension_numbers = #tpu.dot_dimension_numbers<[1], [0], [0], [1], [0, 0, 1, 1], [], []>} : vector<32x32xbf16>, vector<32x128xbf16>, vector<32x128xf32> -> vector<32x128xf32>
    %114 = arith.addf %106, %113 : vector<32x128xf32>
    %c1_58 = arith.constant 1 : index
    %c0_59 = arith.constant 0 : index
    %c0_60 = arith.constant 0 : index
    %115 = vector.load %arg11[%c1_58, %c0_59, %c0_60] : memref<9x32x32xbf16, #tpu.memory_space<vmem>>, vector<1x32x32xbf16>
    %116 = vector.shape_cast %115 : vector<1x32x32xbf16> to vector<32x32xbf16>
    %cst_61 = arith.constant dense<0.000000e+00> : vector<32x32xf32>
    %117 = tpu.matmul %116, %105, %cst_61 {dimension_numbers = #tpu.dot_dimension_numbers<[1], [0], [0], [1], [0, 0, 1, 1], [], []>} : vector<32x32xbf16>, vector<32x32xbf16>, vector<32x32xf32> -> vector<32x32xf32>
    %118 = arith.truncf %117 : vector<32x32xf32> to vector<32x32xbf16>
    %c1_62 = arith.constant 1 : index
    %c0_63 = arith.constant 0 : index
    %c0_64 = arith.constant 0 : index
    %119 = vector.load %arg12[%c1_62, %c0_63, %c0_64] : memref<9x32x128xbf16, #tpu.memory_space<vmem>>, vector<1x32x128xbf16>
    %120 = vector.shape_cast %119 : vector<1x32x128xbf16> to vector<32x128xbf16>
    %cst_65 = arith.constant dense<0.000000e+00> : vector<32x128xf32>
    %121 = tpu.matmul %118, %120, %cst_65 {dimension_numbers = #tpu.dot_dimension_numbers<[1], [0], [0], [1], [0, 0, 1, 1], [], []>} : vector<32x32xbf16>, vector<32x128xbf16>, vector<32x128xf32> -> vector<32x128xf32>
    %122 = arith.addf %114, %121 : vector<32x128xf32>
    %c2 = arith.constant 2 : index
    %c0_66 = arith.constant 0 : index
    %c0_67 = arith.constant 0 : index
    %123 = vector.load %arg11[%c2, %c0_66, %c0_67] : memref<9x32x32xbf16, #tpu.memory_space<vmem>>, vector<1x32x32xbf16>
    %124 = vector.shape_cast %123 : vector<1x32x32xbf16> to vector<32x32xbf16>
    %cst_68 = arith.constant dense<0.000000e+00> : vector<32x32xf32>
    %125 = tpu.matmul %124, %105, %cst_68 {dimension_numbers = #tpu.dot_dimension_numbers<[1], [0], [0], [1], [0, 0, 1, 1], [], []>} : vector<32x32xbf16>, vector<32x32xbf16>, vector<32x32xf32> -> vector<32x32xf32>
    %126 = arith.truncf %125 : vector<32x32xf32> to vector<32x32xbf16>
    %c2_69 = arith.constant 2 : index
    %c0_70 = arith.constant 0 : index
    %c0_71 = arith.constant 0 : index
    %127 = vector.load %arg12[%c2_69, %c0_70, %c0_71] : memref<9x32x128xbf16, #tpu.memory_space<vmem>>, vector<1x32x128xbf16>
    %128 = vector.shape_cast %127 : vector<1x32x128xbf16> to vector<32x128xbf16>
    %cst_72 = arith.constant dense<0.000000e+00> : vector<32x128xf32>
    %129 = tpu.matmul %126, %128, %cst_72 {dimension_numbers = #tpu.dot_dimension_numbers<[1], [0], [0], [1], [0, 0, 1, 1], [], []>} : vector<32x32xbf16>, vector<32x128xbf16>, vector<32x128xf32> -> vector<32x128xf32>
    %130 = arith.addf %122, %129 : vector<32x128xf32>
    %c3 = arith.constant 3 : index
    %c0_73 = arith.constant 0 : index
    %c0_74 = arith.constant 0 : index
    %131 = vector.load %arg11[%c3, %c0_73, %c0_74] : memref<9x32x32xbf16, #tpu.memory_space<vmem>>, vector<1x32x32xbf16>
    %132 = vector.shape_cast %131 : vector<1x32x32xbf16> to vector<32x32xbf16>
    %cst_75 = arith.constant dense<0.000000e+00> : vector<32x32xf32>
    %133 = tpu.matmul %132, %105, %cst_75 {dimension_numbers = #tpu.dot_dimension_numbers<[1], [0], [0], [1], [0, 0, 1, 1], [], []>} : vector<32x32xbf16>, vector<32x32xbf16>, vector<32x32xf32> -> vector<32x32xf32>
    %134 = arith.truncf %133 : vector<32x32xf32> to vector<32x32xbf16>
    %c3_76 = arith.constant 3 : index
    %c0_77 = arith.constant 0 : index
    %c0_78 = arith.constant 0 : index
    %135 = vector.load %arg12[%c3_76, %c0_77, %c0_78] : memref<9x32x128xbf16, #tpu.memory_space<vmem>>, vector<1x32x128xbf16>
    %136 = vector.shape_cast %135 : vector<1x32x128xbf16> to vector<32x128xbf16>
    %cst_79 = arith.constant dense<0.000000e+00> : vector<32x128xf32>
    %137 = tpu.matmul %134, %136, %cst_79 {dimension_numbers = #tpu.dot_dimension_numbers<[1], [0], [0], [1], [0, 0, 1, 1], [], []>} : vector<32x32xbf16>, vector<32x128xbf16>, vector<32x128xf32> -> vector<32x128xf32>
    %138 = arith.addf %130, %137 : vector<32x128xf32>
    %c4 = arith.constant 4 : index
    %c0_80 = arith.constant 0 : index
    %c0_81 = arith.constant 0 : index
    %139 = vector.load %arg11[%c4, %c0_80, %c0_81] : memref<9x32x32xbf16, #tpu.memory_space<vmem>>, vector<1x32x32xbf16>
    %140 = vector.shape_cast %139 : vector<1x32x32xbf16> to vector<32x32xbf16>
    %cst_82 = arith.constant dense<0.000000e+00> : vector<32x32xf32>
    %141 = tpu.matmul %140, %105, %cst_82 {dimension_numbers = #tpu.dot_dimension_numbers<[1], [0], [0], [1], [0, 0, 1, 1], [], []>} : vector<32x32xbf16>, vector<32x32xbf16>, vector<32x32xf32> -> vector<32x32xf32>
    %142 = arith.truncf %141 : vector<32x32xf32> to vector<32x32xbf16>
    %c4_83 = arith.constant 4 : index
    %c0_84 = arith.constant 0 : index
    %c0_85 = arith.constant 0 : index
    %143 = vector.load %arg12[%c4_83, %c0_84, %c0_85] : memref<9x32x128xbf16, #tpu.memory_space<vmem>>, vector<1x32x128xbf16>
    %144 = vector.shape_cast %143 : vector<1x32x128xbf16> to vector<32x128xbf16>
    %cst_86 = arith.constant dense<0.000000e+00> : vector<32x128xf32>
    %145 = tpu.matmul %142, %144, %cst_86 {dimension_numbers = #tpu.dot_dimension_numbers<[1], [0], [0], [1], [0, 0, 1, 1], [], []>} : vector<32x32xbf16>, vector<32x128xbf16>, vector<32x128xf32> -> vector<32x128xf32>
    %146 = arith.addf %138, %145 : vector<32x128xf32>
    %c5 = arith.constant 5 : index
    %c0_87 = arith.constant 0 : index
    %c0_88 = arith.constant 0 : index
    %147 = vector.load %arg11[%c5, %c0_87, %c0_88] : memref<9x32x32xbf16, #tpu.memory_space<vmem>>, vector<1x32x32xbf16>
    %148 = vector.shape_cast %147 : vector<1x32x32xbf16> to vector<32x32xbf16>
    %cst_89 = arith.constant dense<0.000000e+00> : vector<32x32xf32>
    %149 = tpu.matmul %148, %105, %cst_89 {dimension_numbers = #tpu.dot_dimension_numbers<[1], [0], [0], [1], [0, 0, 1, 1], [], []>} : vector<32x32xbf16>, vector<32x32xbf16>, vector<32x32xf32> -> vector<32x32xf32>
    %150 = arith.truncf %149 : vector<32x32xf32> to vector<32x32xbf16>
    %c5_90 = arith.constant 5 : index
    %c0_91 = arith.constant 0 : index
    %c0_92 = arith.constant 0 : index
    %151 = vector.load %arg12[%c5_90, %c0_91, %c0_92] : memref<9x32x128xbf16, #tpu.memory_space<vmem>>, vector<1x32x128xbf16>
    %152 = vector.shape_cast %151 : vector<1x32x128xbf16> to vector<32x128xbf16>
    %cst_93 = arith.constant dense<0.000000e+00> : vector<32x128xf32>
    %153 = tpu.matmul %150, %152, %cst_93 {dimension_numbers = #tpu.dot_dimension_numbers<[1], [0], [0], [1], [0, 0, 1, 1], [], []>} : vector<32x32xbf16>, vector<32x128xbf16>, vector<32x128xf32> -> vector<32x128xf32>
    %154 = arith.addf %146, %153 : vector<32x128xf32>
    %c6 = arith.constant 6 : index
    %c0_94 = arith.constant 0 : index
    %c0_95 = arith.constant 0 : index
    %155 = vector.load %arg11[%c6, %c0_94, %c0_95] : memref<9x32x32xbf16, #tpu.memory_space<vmem>>, vector<1x32x32xbf16>
    %156 = vector.shape_cast %155 : vector<1x32x32xbf16> to vector<32x32xbf16>
    %cst_96 = arith.constant dense<0.000000e+00> : vector<32x32xf32>
    %157 = tpu.matmul %156, %105, %cst_96 {dimension_numbers = #tpu.dot_dimension_numbers<[1], [0], [0], [1], [0, 0, 1, 1], [], []>} : vector<32x32xbf16>, vector<32x32xbf16>, vector<32x32xf32> -> vector<32x32xf32>
    %158 = arith.truncf %157 : vector<32x32xf32> to vector<32x32xbf16>
    %c6_97 = arith.constant 6 : index
    %c0_98 = arith.constant 0 : index
    %c0_99 = arith.constant 0 : index
    %159 = vector.load %arg12[%c6_97, %c0_98, %c0_99] : memref<9x32x128xbf16, #tpu.memory_space<vmem>>, vector<1x32x128xbf16>
    %160 = vector.shape_cast %159 : vector<1x32x128xbf16> to vector<32x128xbf16>
    %cst_100 = arith.constant dense<0.000000e+00> : vector<32x128xf32>
    %161 = tpu.matmul %158, %160, %cst_100 {dimension_numbers = #tpu.dot_dimension_numbers<[1], [0], [0], [1], [0, 0, 1, 1], [], []>} : vector<32x32xbf16>, vector<32x128xbf16>, vector<32x128xf32> -> vector<32x128xf32>
    %162 = arith.addf %154, %161 : vector<32x128xf32>
    %c7 = arith.constant 7 : index
    %c0_101 = arith.constant 0 : index
    %c0_102 = arith.constant 0 : index
    %163 = vector.load %arg11[%c7, %c0_101, %c0_102] : memref<9x32x32xbf16, #tpu.memory_space<vmem>>, vector<1x32x32xbf16>
    %164 = vector.shape_cast %163 : vector<1x32x32xbf16> to vector<32x32xbf16>
    %cst_103 = arith.constant dense<0.000000e+00> : vector<32x32xf32>
    %165 = tpu.matmul %164, %105, %cst_103 {dimension_numbers = #tpu.dot_dimension_numbers<[1], [0], [0], [1], [0, 0, 1, 1], [], []>} : vector<32x32xbf16>, vector<32x32xbf16>, vector<32x32xf32> -> vector<32x32xf32>
    %166 = arith.truncf %165 : vector<32x32xf32> to vector<32x32xbf16>
    %c7_104 = arith.constant 7 : index
    %c0_105 = arith.constant 0 : index
    %c0_106 = arith.constant 0 : index
    %167 = vector.load %arg12[%c7_104, %c0_105, %c0_106] : memref<9x32x128xbf16, #tpu.memory_space<vmem>>, vector<1x32x128xbf16>
    %168 = vector.shape_cast %167 : vector<1x32x128xbf16> to vector<32x128xbf16>
    %cst_107 = arith.constant dense<0.000000e+00> : vector<32x128xf32>
    %169 = tpu.matmul %166, %168, %cst_107 {dimension_numbers = #tpu.dot_dimension_numbers<[1], [0], [0], [1], [0, 0, 1, 1], [], []>} : vector<32x32xbf16>, vector<32x128xbf16>, vector<32x128xf32> -> vector<32x128xf32>
    %170 = arith.addf %162, %169 : vector<32x128xf32>
    %c8 = arith.constant 8 : index
    %c0_108 = arith.constant 0 : index
    %c0_109 = arith.constant 0 : index
    %171 = vector.load %arg11[%c8, %c0_108, %c0_109] : memref<9x32x32xbf16, #tpu.memory_space<vmem>>, vector<1x32x32xbf16>
    %172 = vector.shape_cast %171 : vector<1x32x32xbf16> to vector<32x32xbf16>
    %cst_110 = arith.constant dense<0.000000e+00> : vector<32x32xf32>
    %173 = tpu.matmul %172, %105, %cst_110 {dimension_numbers = #tpu.dot_dimension_numbers<[1], [0], [0], [1], [0, 0, 1, 1], [], []>} : vector<32x32xbf16>, vector<32x32xbf16>, vector<32x32xf32> -> vector<32x32xf32>
    %174 = arith.truncf %173 : vector<32x32xf32> to vector<32x32xbf16>
    %c8_111 = arith.constant 8 : index
    %c0_112 = arith.constant 0 : index
    %c0_113 = arith.constant 0 : index
    %175 = vector.load %arg12[%c8_111, %c0_112, %c0_113] : memref<9x32x128xbf16, #tpu.memory_space<vmem>>, vector<1x32x128xbf16>
    %176 = vector.shape_cast %175 : vector<1x32x128xbf16> to vector<32x128xbf16>
    %cst_114 = arith.constant dense<0.000000e+00> : vector<32x128xf32>
    %177 = tpu.matmul %174, %176, %cst_114 {dimension_numbers = #tpu.dot_dimension_numbers<[1], [0], [0], [1], [0, 0, 1, 1], [], []>} : vector<32x32xbf16>, vector<32x128xbf16>, vector<32x128xf32> -> vector<32x128xf32>
    %178 = arith.addf %170, %177 : vector<32x128xf32>
    %c0_115 = arith.constant 0 : index
    %c0_116 = arith.constant 0 : index
    %179 = vector.load %arg13[%c0_115, %c0_116] : memref<1x128xf32, #tpu.memory_space<vmem>>, vector<1x128xf32>
    %180 = vector.broadcast %179 : vector<1x128xf32> to vector<32x128xf32>
    %181 = arith.addf %178, %180 : vector<32x128xf32>
    %cst_117 = arith.constant 5.000000e-01 : f32
    %182 = vector.broadcast %cst_117 : f32 to vector<32x128xf32>
    %183 = arith.mulf %182, %181 : vector<32x128xf32>
    %cst_118 = arith.constant 4.471500e-02 : f32
    %184 = vector.broadcast %cst_118 : f32 to vector<32x128xf32>
    %185 = arith.mulf %184, %181 : vector<32x128xf32>
    %186 = arith.mulf %185, %181 : vector<32x128xf32>
    %187 = arith.mulf %186, %181 : vector<32x128xf32>
    %188 = arith.addf %181, %187 : vector<32x128xf32>
    %cst_119 = arith.constant 0.797884583 : f32
    %189 = vector.broadcast %cst_119 : f32 to vector<32x128xf32>
    %190 = arith.mulf %189, %188 : vector<32x128xf32>
    %191 = math.tanh %190 : vector<32x128xf32>
    %cst_120 = arith.constant 1.000000e+00 : f32
    %192 = vector.broadcast %cst_120 : f32 to vector<32x128xf32>
    %193 = arith.addf %192, %191 : vector<32x128xf32>
    %194 = arith.mulf %183, %193 : vector<32x128xf32>
    %195 = arith.truncf %194 : vector<32x128xf32> to vector<32x128xbf16>
    %c0_121 = arith.constant 0 : index
    %c0_122 = arith.constant 0 : index
    %196 = vector.load %arg14[%c0_121, %c0_122] : memref<128x32xbf16, #tpu.memory_space<vmem>>, vector<128x32xbf16>
    %cst_123 = arith.constant dense<0.000000e+00> : vector<32x32xf32>
    %197 = tpu.matmul %195, %196, %cst_123 {dimension_numbers = #tpu.dot_dimension_numbers<[1], [0], [0], [1], [0, 0, 1, 1], [], []>} : vector<32x128xbf16>, vector<128x32xbf16>, vector<32x32xf32> -> vector<32x32xf32>
    %c0_124 = arith.constant 0 : index
    %c0_125 = arith.constant 0 : index
    %198 = vector.load %arg15[%c0_124, %c0_125] : memref<1x32xf32, #tpu.memory_space<vmem>>, vector<1x32xf32>
    %199 = vector.broadcast %198 : vector<1x32xf32> to vector<32x32xf32>
    %200 = arith.addf %197, %199 : vector<32x32xf32>
    %201 = arith.addf %80, %200 : vector<32x32xf32>
    %202 = vector.broadcast %1 : vector<32x1xf32> to vector<32x32xf32>
    %203 = arith.mulf %201, %202 : vector<32x32xf32>
    %c0_126 = arith.constant 0 : index
    %c0_127 = arith.constant 0 : index
    %204 = vector.load %arg16[%c0_126, %c0_127] : memref<32x32xf32, #tpu.memory_space<vmem>>, vector<32x32xf32>
    tpu.vector_store %arg16[%c0_126, %c0_127], %203 {strides = array<i32>} : memref<32x32xf32, #tpu.memory_space<vmem>>, vector<32x32xf32>,
    return
  }
  func.func @transform_0(%arg0: i32) -> (i32, i32) {
    %c0_i32 = arith.constant 0 : i32
    %c0_i32_0 = arith.constant 0 : i32
    %c0_i32_1 = arith.constant 0 : i32
    return %c0_i32, %c0_i32_0 : i32, i32
  }
  func.func @transform_1(%arg0: i32) -> (i32, i32) {
    %c0_i32 = arith.constant 0 : i32
    %c0_i32_0 = arith.constant 0 : i32
    %c0_i32_1 = arith.constant 0 : i32
    return %c0_i32, %c0_i32_0 : i32, i32
  }
  func.func @transform_2(%arg0: i32) -> (i32, i32) {
    %c0_i32 = arith.constant 0 : i32
    %c0_i32_0 = arith.constant 0 : i32
    %c0_i32_1 = arith.constant 0 : i32
    return %c0_i32, %c0_i32_0 : i32, i32
  }
  func.func @transform_3(%arg0: i32) -> (i32, i32) {
    %c0_i32 = arith.constant 0 : i32
    %c0_i32_0 = arith.constant 0 : i32
    %c0_i32_1 = arith.constant 0 : i32
    return %c0_i32, %c0_i32_0 : i32, i32
  }
  func.func @transform_4(%arg0: i32) -> (i32, i32) {
    %c0_i32 = arith.constant 0 : i32
    %c0_i32_0 = arith.constant 0 : i32
    %c0_i32_1 = arith.constant 0 : i32
    return %c0_i32, %c0_i32_0 : i32, i32
  }
  func.func @transform_5(%arg0: i32) -> (i32, i32, i32) {
    %c0_i32 = arith.constant 0 : i32
    %c0_i32_0 = arith.constant 0 : i32
    %c0_i32_1 = arith.constant 0 : i32
    %c0_i32_2 = arith.constant 0 : i32
    return %c0_i32, %c0_i32_0, %c0_i32_1 : i32, i32, i32
  }
  func.func @transform_6(%arg0: i32) -> (i32, i32) {
    %c0_i32 = arith.constant 0 : i32
    %c0_i32_0 = arith.constant 0 : i32
    %c0_i32_1 = arith.constant 0 : i32
    return %c0_i32, %c0_i32_0 : i32, i32
  }
  func.func @transform_7(%arg0: i32) -> (i32, i32, i32) {
    %c0_i32 = arith.constant 0 : i32
    %c0_i32_0 = arith.constant 0 : i32
    %c0_i32_1 = arith.constant 0 : i32
    %c0_i32_2 = arith.constant 0 : i32
    return %c0_i32, %c0_i32_0, %c0_i32_1 : i32, i32, i32
  }
  func.func @transform_8(%arg0: i32) -> (i32, i32) {
    %c0_i32 = arith.constant 0 : i32
    %c0_i32_0 = arith.constant 0 : i32
    %c0_i32_1 = arith.constant 0 : i32
    return %c0_i32, %c0_i32_0 : i32, i32
  }
  func.func @transform_9(%arg0: i32) -> (i32, i32) {
    %c0_i32 = arith.constant 0 : i32
    %c0_i32_0 = arith.constant 0 : i32
    %c0_i32_1 = arith.constant 0 : i32
    return %c0_i32, %c0_i32_0 : i32, i32
  }
  func.func @transform_10(%arg0: i32) -> (i32, i32, i32) {
    %c0_i32 = arith.constant 0 : i32
    %c0_i32_0 = arith.constant 0 : i32
    %c0_i32_1 = arith.constant 0 : i32
    %c0_i32_2 = arith.constant 0 : i32
    return %c0_i32, %c0_i32_0, %c0_i32_1 : i32, i32, i32
  }
  func.func @transform_11(%arg0: i32) -> (i32, i32, i32) {
    %c0_i32 = arith.constant 0 : i32
    %c0_i32_0 = arith.constant 0 : i32
    %c0_i32_1 = arith.constant 0 : i32
    %c0_i32_2 = arith.constant 0 : i32
    return %c0_i32, %c0_i32_0, %c0_i32_1 : i32, i32, i32
  }
  func.func @transform_12(%arg0: i32) -> (i32, i32) {
    %c0_i32 = arith.constant 0 : i32
    %c0_i32_0 = arith.constant 0 : i32
    %c0_i32_1 = arith.constant 0 : i32
    return %c0_i32, %c0_i32_0 : i32, i32
  }
  func.func @transform_13(%arg0: i32) -> (i32, i32) {
    %c0_i32 = arith.constant 0 : i32
    %c0_i32_0 = arith.constant 0 : i32
    %c0_i32_1 = arith.constant 0 : i32
    return %c0_i32, %c0_i32_0 : i32, i32
  }
  func.func @transform_14(%arg0: i32) -> (i32, i32) {
    %c0_i32 = arith.constant 0 : i32
    %c0_i32_0 = arith.constant 0 : i32
    %c0_i32_1 = arith.constant 0 : i32
    return %c0_i32, %c0_i32_0 : i32, i32
  }
  func.func @transform_15(%arg0: i32) -> (i32, i32) {
    %c0_i32 = arith.constant 0 : i32
    %c0_i32_0 = arith.constant 0 : i32
    %c0_i32_1 = arith.constant 0 : i32
    return %c0_i32, %c0_i32_0 : i32, i32
  }
}

</mosaic_0001>

<llo_original>
// kernel: tpu_custom_call.1
$region0: #{tpu_custom_call.1}
  #allocation0 [shape = 'u32[]', space=smem, size = 0x4, offset = 0x4, fixed_abs, tag = 'smem constant byte address 0x4 - core index']
  #allocation1 [shape = 'u32[144,128]{1,0:T(1,128)}', space=vmem, size = 0x12000, scoped, tag = 'internal scratch']
  %s0 = inlined_call_operand.vmem [shape: f32[32,32], index: 0, kind: input, shape index: {}]
  %s1 = inlined_call_operand.vmem [shape: f32[32,1], index: 1, kind: input, shape index: {}]
  %s2 = inlined_call_operand.vmem [shape: f32[32,32], index: 2, kind: input, shape index: {}]
  %s3 = inlined_call_operand.vmem [shape: f32[1,32], index: 3, kind: input, shape index: {}]
  %s4 = inlined_call_operand.vmem [shape: f32[1,32], index: 4, kind: input, shape index: {}]
  %s5 = inlined_call_operand.vmem [shape: bf16[2,32,32], index: 5, kind: input, shape index: {}]
  %s6 = inlined_call_operand.hbm [shape: bf16[32,32], index: 6, kind: input, shape index: {}]
  %s7 = inlined_call_operand.hbm [shape: bf16[2,32,32], index: 7, kind: input, shape index: {}]
  %s8 = inlined_call_operand.vmem [shape: f32[1,32], index: 8, kind: input, shape index: {}]
  %s9 = inlined_call_operand.vmem [shape: f32[1,32], index: 9, kind: input, shape index: {}]
  %s10 = inlined_call_operand.hbm [shape: bf16[9,32,32], index: 10, kind: input, shape index: {}]
  %s11 = inlined_call_operand.hbm [shape: bf16[9,32,128], index: 11, kind: input, shape index: {}]
  %s12 = inlined_call_operand.vmem [shape: f32[1,128], index: 12, kind: input, shape index: {}]
  %s13 = inlined_call_operand.vmem [shape: bf16[128,32], index: 13, kind: input, shape index: {}]
  %s14 = inlined_call_operand.vmem [shape: f32[1,32], index: 14, kind: input, shape index: {}]
  %s15 = inlined_call_operand.hbm [shape: f32[32,32], index: 15, kind: output, shape index: {}]
  %s16 = sld [smem:[#allocation0]]
  $region86: #{tpu_custom_call.1} parent=0
    _
  %s18 = ssub.s32 1, %s16
  %s19 = scalar_select 0, %s18, %s16
  $region1: #{tpu_custom_call.1} parent=0
    #allocation2 [shape = 'u8[8192]{0}', space=vmem, size = 0x2000, scoped, tag = 'input window, operand 6, single buffered']
    #allocation3 [shape = 's32[1]{0}', space=sflag, size = 0x4, scoped, tag = 'scoped memory for tpu_custom_call.1']
    #allocation4 [shape = 's32[1]{0}', space=sflag, size = 0x4, scoped, tag = 'scoped memory for tpu_custom_call.1']
    #allocation5 [shape = 'u8[16384]{0}', space=vmem, size = 0x4000, scoped, tag = 'input window, operand 7, single buffered']
    #allocation6 [shape = 's32[1]{0}', space=sflag, size = 0x4, scoped, tag = 'scoped memory for tpu_custom_call.1']
    #allocation7 [shape = 'u8[73728]{0}', space=vmem, size = 0x12000, scoped, tag = 'input window, operand 10, single buffered']
    #allocation8 [shape = 'u8[73728]{0}', space=vmem, size = 0x12000, scoped, tag = 'input window, operand 11, single buffered']
    #allocation9 [shape = 's32[1]{0}', space=sflag, size = 0x4, scoped, tag = 'scoped memory for tpu_custom_call.1']
    #allocation10 [shape = 'u8[16384]{0}', space=vmem, size = 0x4000, scoped, tag = 'output window, operand 0, single buffered']
    %20 = vsyncpa [#allocation3], 0
    %21 = vsyncpa [#allocation6], 0
    %22 = vsyncpa [#allocation9], 0
    %23 = vsyncpa [#allocation4], 0
    // Predicated region
    $region2: #{tpu_custom_call.1} parent=1 // pred_check
      _
    $region3: #{tpu_custom_call.1} parent=1 // pred_check_branch
      %25 = sbr.rel (0) target = $region5
    $region4: #{tpu_custom_call.1} parent=1 // pred_region
      _
    $region5: #{tpu_custom_call.1} parent=1 // pred_fallthru
      _
    // Predicated region
    $region6: #{tpu_custom_call.1} parent=1 // pred_check
      _
    $region7: #{tpu_custom_call.1} parent=1 // pred_check_branch
      %27 = sbr.rel (0) target = $region9
    $region8: #{tpu_custom_call.1} parent=1 // pred_region
      _
    $region9: #{tpu_custom_call.1} parent=1 // pred_fallthru
      _
    // Predicated region
    $region10: #{tpu_custom_call.1} parent=1 // pred_check
      _
    $region11: #{tpu_custom_call.1} parent=1 // pred_check_branch
      %29 = sbr.rel (0) target = $region13
    $region12: #{tpu_custom_call.1} parent=1 // pred_region
      _
    $region13: #{tpu_custom_call.1} parent=1 // pred_fallthru
      _
    // Predicated region
    $region14: #{tpu_custom_call.1} parent=1 // pred_check
      _
    $region15: #{tpu_custom_call.1} parent=1 // pred_check_branch
      %31 = sbr.rel (0) target = $region17
    $region16: #{tpu_custom_call.1} parent=1 // pred_region
      _
    $region17: #{tpu_custom_call.1} parent=1 // pred_fallthru
      _
    // Predicated region
    $region18: #{tpu_custom_call.1} parent=1 // pred_check
      _
    $region19: #{tpu_custom_call.1} parent=1 // pred_check_branch
      %33 = sbr.rel (0) target = $region21
    $region20: #{tpu_custom_call.1} parent=1 // pred_region
      _
    $region21: #{tpu_custom_call.1} parent=1 // pred_fallthru
      _
    // Predicated region
    $region22: #{tpu_custom_call.1} parent=1 // pred_check
      _
    $region23: #{tpu_custom_call.1} parent=1 // pred_check_branch
      %35 = sbr.rel (0) target = $region25
    $region24: #{tpu_custom_call.1} parent=1 // pred_region
      _
    $region25: #{tpu_custom_call.1} parent=1 // pred_fallthru
      _
    // Predicated region
    $region26: #{tpu_custom_call.1} parent=1 // pred_check
      _
    $region27: #{tpu_custom_call.1} parent=1 // pred_check_branch
      %37 = sbr.rel (0) target = $region29
    $region28: #{tpu_custom_call.1} parent=1 // pred_region
      %s39 = ssub.s32 256, 256
      %40 = vsyncadd [#allocation3], %s39
      %s41 = sshll.u32 [#allocation2], 4
      %s42 = int_to_ptr.vmem [resolvable:$true] %s41
      %47 = dma.hbm_to_vmem [thread:$0]  %s6, 256, %s42, [#allocation3], 64, 64, 4
    $region29: #{tpu_custom_call.1} parent=1 // pred_fallthru
      _
    // Predicated region
    $region30: #{tpu_custom_call.1} parent=1 // pred_check
      _
    $region31: #{tpu_custom_call.1} parent=1 // pred_check_branch
      %49 = sbr.rel (0) target = $region33
    $region32: #{tpu_custom_call.1} parent=1 // pred_region
      %s51 = ssub.s32 512, 512
      %52 = vsyncadd [#allocation6], %s51
      %s53 = sshll.u32 [#allocation5], 4
      %s54 = int_to_ptr.vmem [resolvable:$true] %s53
      %59 = dma.hbm_to_vmem [thread:$0]  %s7, 512, %s54, [#allocation6], 64, 64, 4
    $region33: #{tpu_custom_call.1} parent=1 // pred_fallthru
      _
    // Predicated region
    $region34: #{tpu_custom_call.1} parent=1 // pred_check
      _
    $region35: #{tpu_custom_call.1} parent=1 // pred_check_branch
      %61 = sbr.rel (0) target = $region37
    $region36: #{tpu_custom_call.1} parent=1 // pred_region
      _
    $region37: #{tpu_custom_call.1} parent=1 // pred_fallthru
      _
    // Predicated region
    $region38: #{tpu_custom_call.1} parent=1 // pred_check
      _
    $region39: #{tpu_custom_call.1} parent=1 // pred_check_branch
      %63 = sbr.rel (0) target = $region41
    $region40: #{tpu_custom_call.1} parent=1 // pred_region
      _
    $region41: #{tpu_custom_call.1} parent=1 // pred_fallthru
      _
    // Predicated region
    $region42: #{tpu_custom_call.1} parent=1 // pred_check
      _
    $region43: #{tpu_custom_call.1} parent=1 // pred_check_branch
      %65 = sbr.rel (0) target = $region45
    $region44: #{tpu_custom_call.1} parent=1 // pred_region
      %s67 = ssub.s32 2304, 2304
      %68 = vsyncadd [#allocation6], %s67
      %s69 = sshll.u32 [#allocation7], 4
      %s70 = int_to_ptr.vmem [resolvable:$true] %s69
      %75 = dma.hbm_to_vmem [thread:$0]  %s10, 2304, %s70, [#allocation6], 64, 64, 4
    $region45: #{tpu_custom_call.1} parent=1 // pred_fallthru
      _
    // Predicated region
    $region46: #{tpu_custom_call.1} parent=1 // pred_check
      _
    $region47: #{tpu_custom_call.1} parent=1 // pred_check_branch
      %77 = sbr.rel (0) target = $region49
    $region48: #{tpu_custom_call.1} parent=1 // pred_region
      %s79 = ssub.s32 2304, 2304
      %80 = vsyncadd [#allocation9], %s79
      %s81 = sshll.u32 [#allocation8], 4
      %s82 = int_to_ptr.vmem [resolvable:$true] %s81
      %87 = dma.hbm_to_vmem [thread:$0]  %s11, 2304, %s82, [#allocation9], 64, 64, 4
    $region49: #{tpu_custom_call.1} parent=1 // pred_fallthru
      _
    // Predicated region
    $region50: #{tpu_custom_call.1} parent=1 // pred_check
      _
    $region51: #{tpu_custom_call.1} parent=1 // pred_check_branch
      %89 = sbr.rel (0) target = $region53
    $region52: #{tpu_custom_call.1} parent=1 // pred_region
      _
    $region53: #{tpu_custom_call.1} parent=1 // pred_fallthru
      _
    // Predicated region
    $region54: #{tpu_custom_call.1} parent=1 // pred_check
      _
    $region55: #{tpu_custom_call.1} parent=1 // pred_check_branch
      %91 = sbr.rel (0) target = $region57
    $region56: #{tpu_custom_call.1} parent=1 // pred_region
      _
    $region57: #{tpu_custom_call.1} parent=1 // pred_fallthru
      _
    // Predicated region
    $region58: #{tpu_custom_call.1} parent=1 // pred_check
      _
    $region59: #{tpu_custom_call.1} parent=1 // pred_check_branch
      %93 = sbr.rel (0) target = $region61
    $region60: #{tpu_custom_call.1} parent=1 // pred_region
      _
    $region61: #{tpu_custom_call.1} parent=1 // pred_fallthru
      _
    // Predicated region
    $region62: #{tpu_custom_call.1} parent=1 // pred_check
      _
    $region63: #{tpu_custom_call.1} parent=1 // pred_check_branch
      %95 = sbr.rel (0) target = $region65
    $region64: #{tpu_custom_call.1} parent=1 // pred_region
      %96 = dma.done [#allocation3], 256
    $region65: #{tpu_custom_call.1} parent=1 // pred_fallthru
      _
    // Predicated region
    $region66: #{tpu_custom_call.1} parent=1 // pred_check
      _
    $region67: #{tpu_custom_call.1} parent=1 // pred_check_branch
      %98 = sbr.rel (0) target = $region69
    $region68: #{tpu_custom_call.1} parent=1 // pred_region
      %99 = dma.done [#allocation6], 512
    $region69: #{tpu_custom_call.1} parent=1 // pred_fallthru
      _
    // Predicated region
    $region70: #{tpu_custom_call.1} parent=1 // pred_check
      _
    $region71: #{tpu_custom_call.1} parent=1 // pred_check_branch
      %101 = sbr.rel (0) target = $region73
    $region72: #{tpu_custom_call.1} parent=1 // pred_region
      %102 = dma.done [#allocation6], 2304
    $region73: #{tpu_custom_call.1} parent=1 // pred_fallthru
      _
    // Predicated region
    $region74: #{tpu_custom_call.1} parent=1 // pred_check
      _
    $region75: #{tpu_custom_call.1} parent=1 // pred_check_branch
      %104 = sbr.rel (0) target = $region77
    $region76: #{tpu_custom_call.1} parent=1 // pred_region
      %105 = dma.done [#allocation9], 2304
    $region77: #{tpu_custom_call.1} parent=1 // pred_fallthru
      _
    %v107 = vld [vmem:[%s0] sm:$0xff]
    %v108 = vld [vmem:[%s0 + $0x8] sm:$0xff]
    %v109 = vld [vmem:[%s0 + $0x10] sm:$0xff]
    %v110 = vld [vmem:[%s0 + $0x18] sm:$0xff]
    %v111 = vld [vmem:[%s1] sm:$0xff]
    %v112 = vld [vmem:[%s1 + $0x8] sm:$0xff]
    %v113 = vld [vmem:[%s1 + $0x10] sm:$0xff]
    %v114 = vld [vmem:[%s1 + $0x18] sm:$0xff]
    %v115 = vld [vmem:[%s2] sm:$0xff]
    %v116 = vld [vmem:[%s2 + $0x8] sm:$0xff]
    %v117 = vld [vmem:[%s2 + $0x10] sm:$0xff]
    %v118 = vld [vmem:[%s2 + $0x18] sm:$0xff]
    %v119 = vld [vmem:[%s3] sm:$0x1]
    %v120 = vld [vmem:[%s4] sm:$0x1]
    %vm121 = vcmask 261120
    %v122 = vsel %vm121, %v107, 0.0
    %123 = vadd.xlane.f32.xlu0 %v122
    %v124 = vpop.xlane.xlu0 %123
    %v125 = vsel %vm121, %v108, 0.0
    %126 = vadd.xlane.f32.xlu0 %v125
    %v127 = vpop.xlane.xlu0 %126
    %v128 = vsel %vm121, %v109, 0.0
    %129 = vadd.xlane.f32.xlu0 %v128
    %v130 = vpop.xlane.xlu0 %129
    %v131 = vsel %vm121, %v110, 0.0
    %132 = vadd.xlane.f32.xlu0 %v131
    %v133 = vpop.xlane.xlu0 %132
    %v134 = vrcp.pop 32.0
    %v135 = vmul.f32 %v124, %v134
    %v136 = vmul.f32 %v127, %v134
    %v137 = vmul.f32 %v130, %v134
    %v138 = vmul.f32 %v133, %v134
    %v139 = vsub.f32 %v107, %v135
    %v140 = vsub.f32 %v108, %v136
    %v141 = vsub.f32 %v109, %v137
    %v142 = vsub.f32 %v110, %v138
    %v143 = vmul.f32 %v139, %v139
    %v144 = vmul.f32 %v140, %v140
    %v145 = vmul.f32 %v141, %v141
    %v146 = vmul.f32 %v142, %v142
    %v147 = vsel %vm121, %v143, 0.0
    %148 = vadd.xlane.f32.xlu0 %v147
    %v149 = vpop.xlane.xlu0 %148
    %v150 = vsel %vm121, %v144, 0.0
    %151 = vadd.xlane.f32.xlu0 %v150
    %v152 = vpop.xlane.xlu0 %151
    %v153 = vsel %vm121, %v145, 0.0
    %154 = vadd.xlane.f32.xlu0 %v153
    %v155 = vpop.xlane.xlu0 %154
    %v156 = vsel %vm121, %v146, 0.0
    %157 = vadd.xlane.f32.xlu0 %v156
    %v158 = vpop.xlane.xlu0 %157
    %v159 = vmul.f32 %v149, %v134
    %v160 = vmul.f32 %v152, %v134
    %v161 = vmul.f32 %v155, %v134
    %v162 = vmul.f32 %v158, %v134
    %v163 = vadd.f32 %v159, 1e-12
    %v164 = vadd.f32 %v160, 1e-12
    %v165 = vadd.f32 %v161, 1e-12
    %v166 = vadd.f32 %v162, 1e-12
    %v167 = vrsqrt.pop %v163
    %v168 = vrsqrt.pop %v164
    %v169 = vrsqrt.pop %v165
    %v170 = vrsqrt.pop %v166
    %v171 = vmul.f32 %v139, %v167
    %v172 = vmul.f32 %v140, %v168
    %v173 = vmul.f32 %v141, %v169
    %v174 = vmul.f32 %v142, %v170
    %v176 = vlaneseq
    %v177 = vshrl.u32 %v176, 7
    %v178 = vsub.s32 0, %v177
    %v179 = vrot.slane %v119, %v178
    %v181 = vmul.f32 %v171, %v179
    %v182 = vmul.f32 %v172, %v179
    %v183 = vmul.f32 %v173, %v179
    %v184 = vmul.f32 %v174, %v179
    %v186 = vlaneseq
    %v187 = vshrl.u32 %v186, 7
    %v188 = vsub.s32 0, %v187
    %v189 = vrot.slane %v120, %v188
    %v191 = vadd.f32 %v181, %v189
    %v192 = vadd.f32 %v182, %v189
    %v193 = vadd.f32 %v183, %v189
    %v194 = vadd.f32 %v184, %v189
    %v195 = vpack.c.bf16 %v192, %v191
    %v196 = vpack.c.bf16 %v194, %v193
    %v197 = vld [vmem:[#allocation2] sm:$0xf]
    %v198 = vld [vmem:[#allocation2 + $0x4] sm:$0xf]
    %v199 = vld [vmem:[#allocation2 + $0x8] sm:$0xf]
    %v200 = vld [vmem:[#allocation2 + $0xc] sm:$0xf]
    %v205 = vunpack.c.l.b16 %v197
    %v206 = vunpack.c.l.b16 %v198
    %v207 = vunpack.c.l.b16 %v199
    %v208 = vunpack.c.l.b16 %v200
    %v209 = vpack.c.b16 %v206, %v205
    %v210 = vpack.c.b16 %v208, %v207
    %v214 = vsel %vm121, %v195, 0
    %v217 = vsel %vm121, %v196, 0
    %219 = vmatprep.subr.bf16.mxu0 0
    %220 = vmatpush1.bf16.msra.mxu0 0
    %221 = vmatprep.subr.bf16.mxu0 0
    %222 = vmatpush1.bf16.msra.mxu0 0
    %223 = vmatprep.subr.bf16.mxu0 0
    %224 = vmatpush1.bf16.msra.mxu0 0
    %225 = vmatprep.subr.bf16.mxu0 0
    %226 = vmatpush1.bf16.msra.mxu0 0
    %227 = vmatprep.subr.bf16.mxu0 0
    %228 = vmatpush1.bf16.msra.mxu0 0
    %229 = vmatprep.subr.bf16.mxu0 0
    %230 = vmatpush1.bf16.msra.mxu0 0
    %231 = vmatprep.subr.bf16.mxu0 0
    %232 = vmatpush1.bf16.msra.mxu0 %v210
    %233 = vmatprep.subr.bf16.mxu0 0
    %234 = vmatpush1.bf16.msra.mxu0 %v209
    %235 = vmatprep.subr.bf16.mxu0 0
    %236 = vmatpush2.bf16.msra.mxu0 0
    %237 = vmatprep.subr.bf16.mxu0 0
    %238 = vmatpush2.bf16.msra.mxu0 0
    %239 = vmatprep.subr.bf16.mxu0 0
    %240 = vmatpush2.bf16.msra.mxu0 0
    %241 = vmatprep.subr.bf16.mxu0 0
    %242 = vmatpush2.bf16.msra.mxu0 0
    %243 = vmatprep.subr.bf16.mxu0 0
    %244 = vmatpush2.bf16.msra.mxu0 0
    %245 = vmatprep.subr.bf16.mxu0 0
    %246 = vmatpush2.bf16.msra.mxu0 0
    %247 = vmatprep.subr.bf16.mxu0 0
    %248 = vmatpush2.bf16.msra.mxu0 0
    %249 = vmatprep.subr.bf16.mxu0 0
    %250 = vmatpush2.bf16.msra.mxu0 0
    %251 = vmatprep.mubr.bf16.mxu0 0
    %252 = vmatmul.mubr.bf16.gmra.mxu0 %v214
    %v253 = vpop.f32.mrf.mxu0
    %v254 = vadd.f32 0.0, %v253
    %v255 = vpop.f32.mrf.mxu0
    %v256 = vpop.f32.mrf.mxu0
    %v257 = vadd.f32 0.0, %v256
    %v258 = vpop.f32.mrf.mxu0
    %259 = vmatprep.mubr.bf16.mxu0 0
    %260 = vmatmul.mubr.bf16.gmra.mxu0 %v217
    %v261 = vpop.f32.mrf.mxu0
    %v262 = vadd.f32 0.0, %v261
    %v263 = vpop.f32.mrf.mxu0
    %v264 = vpop.f32.mrf.mxu0
    %v265 = vadd.f32 0.0, %v264
    %v266 = vpop.f32.mrf.mxu0
    %267 = vdwg.mxu0
    %v268 = vpack.c.bf16 %v257, %v254
    %v269 = vpack.c.bf16 %v265, %v262
    %v270 = vld [vmem:[%s5] sm:$0xf]
    %v271 = vld [vmem:[%s5 + $0x4] sm:$0xf]
    %v272 = vld [vmem:[%s5 + $0x8] sm:$0xf]
    %v273 = vld [vmem:[%s5 + $0xc] sm:$0xf]
    %v278 = vunpack.c.l.b16 %v270
    %v279 = vunpack.c.l.b16 %v271
    %v280 = vunpack.c.l.b16 %v272
    %v281 = vunpack.c.l.b16 %v273
    %v282 = vpack.c.b16 %v279, %v278
    %v283 = vpack.c.b16 %v281, %v280
    %286 = vmatprep.subr.bf16.mxu0 0
    %287 = vmatpush1.bf16.msra.mxu0 0
    %288 = vmatprep.subr.bf16.mxu0 0
    %289 = vmatpush1.bf16.msra.mxu0 0
    %290 = vmatprep.subr.bf16.mxu0 0
    %291 = vmatpush1.bf16.msra.mxu0 0
    %292 = vmatprep.subr.bf16.mxu0 0
    %293 = vmatpush1.bf16.msra.mxu0 0
    %294 = vmatprep.subr.bf16.mxu0 0
    %295 = vmatpush1.bf16.msra.mxu0 0
    %296 = vmatprep.subr.bf16.mxu0 0
    %297 = vmatpush1.bf16.msra.mxu0 0
    %298 = vmatprep.subr.bf16.mxu0 0
    %299 = vmatpush1.bf16.msra.mxu0 %v283
    %300 = vmatprep.subr.bf16.mxu0 0
    %301 = vmatpush1.bf16.msra.mxu0 %v282
    %302 = vmatprep.subr.bf16.mxu0 0
    %303 = vmatpush2.bf16.msra.mxu0 0
    %304 = vmatprep.subr.bf16.mxu0 0
    %305 = vmatpush2.bf16.msra.mxu0 0
    %306 = vmatprep.subr.bf16.mxu0 0
    %307 = vmatpush2.bf16.msra.mxu0 0
    %308 = vmatprep.subr.bf16.mxu0 0
    %309 = vmatpush2.bf16.msra.mxu0 0
    %310 = vmatprep.subr.bf16.mxu0 0
    %311 = vmatpush2.bf16.msra.mxu0 0
    %312 = vmatprep.subr.bf16.mxu0 0
    %313 = vmatpush2.bf16.msra.mxu0 0
    %314 = vmatprep.subr.bf16.mxu0 0
    %315 = vmatpush2.bf16.msra.mxu0 0
    %316 = vmatprep.subr.bf16.mxu0 0
    %317 = vmatpush2.bf16.msra.mxu0 0
    %318 = vmatprep.mubr.bf16.mxu0 0
    %319 = vmatmul.mubr.bf16.gmra.mxu0 %v214
    %v320 = vpop.f32.mrf.mxu0
    %v321 = vadd.f32 0.0, %v320
    %v322 = vpop.f32.mrf.mxu0
    %v323 = vpop.f32.mrf.mxu0
    %v324 = vadd.f32 0.0, %v323
    %v325 = vpop.f32.mrf.mxu0
    %326 = vmatprep.mubr.bf16.mxu0 0
    %327 = vmatmul.mubr.bf16.gmra.mxu0 %v217
    %v328 = vpop.f32.mrf.mxu0
    %v329 = vadd.f32 0.0, %v328
    %v330 = vpop.f32.mrf.mxu0
    %v331 = vpop.f32.mrf.mxu0
    %v332 = vadd.f32 0.0, %v331
    %v333 = vpop.f32.mrf.mxu0
    %334 = vdwg.mxu0
    %v335 = vpack.c.bf16 %v324, %v321
    %v336 = vpack.c.bf16 %v332, %v329
    %v338 = vsel %vm121, %v335, 0
    %v341 = vsel %vm121, %v336, 0
    %v344 = vsel %vm121, %v268, 0
    %v347 = vsel %vm121, %v269, 0
    %349 = vmatprep.subr.bf16.mxu0 0
    %350 = vmatpush1.bf16.xpose.msra.mxu0 0
    %351 = vmatprep.subr.bf16.mxu0 0
    %352 = vmatpush1.bf16.xpose.msra.mxu0 0
    %353 = vmatprep.subr.bf16.mxu0 0
    %354 = vmatpush1.bf16.xpose.msra.mxu0 0
    %355 = vmatprep.subr.bf16.mxu0 0
    %356 = vmatpush1.bf16.xpose.msra.mxu0 0
    %357 = vmatprep.subr.bf16.mxu0 0
    %358 = vmatpush1.bf16.xpose.msra.mxu0 0
    %359 = vmatprep.subr.bf16.mxu0 0
    %360 = vmatpush1.bf16.xpose.msra.mxu0 0
    %361 = vmatprep.subr.bf16.mxu0 0
    %362 = vmatpush1.bf16.xpose.msra.mxu0 %v347
    %363 = vmatprep.subr.bf16.mxu0 0
    %364 = vmatpush1.bf16.xpose.msra.mxu0 %v344
    %365 = vmatprep.subr.bf16.mxu0 0
    %366 = vmatpush2.bf16.xpose.msra.mxu0 0
    %367 = vmatprep.subr.bf16.mxu0 0
    %368 = vmatpush2.bf16.xpose.msra.mxu0 0
    %369 = vmatprep.subr.bf16.mxu0 0
    %370 = vmatpush2.bf16.xpose.msra.mxu0 0
    %371 = vmatprep.subr.bf16.mxu0 0
    %372 = vmatpush2.bf16.xpose.msra.mxu0 0
    %373 = vmatprep.subr.bf16.mxu0 0
    %374 = vmatpush2.bf16.xpose.msra.mxu0 0
    %375 = vmatprep.subr.bf16.mxu0 0
    %376 = vmatpush2.bf16.xpose.msra.mxu0 0
    %377 = vmatprep.subr.bf16.mxu0 0
    %378 = vmatpush2.bf16.xpose.msra.mxu0 0
    %379 = vmatprep.subr.bf16.mxu0 0
    %380 = vmatpush2.bf16.xpose.msra.mxu0 0
    %381 = vmatprep.mubr.bf16.mxu0 0
    %382 = vmatmul.mubr.bf16.gmra.mxu0 %v338
    %v383 = vpop.f32.mrf.mxu0
    %v384 = vadd.f32 %v115, %v383
    %v385 = vpop.f32.mrf.mxu0
    %v386 = vpop.f32.mrf.mxu0
    %v387 = vadd.f32 %v116, %v386
    %v388 = vpop.f32.mrf.mxu0
    %389 = vmatprep.mubr.bf16.mxu0 0
    %390 = vmatmul.mubr.bf16.gmra.mxu0 %v341
    %v391 = vpop.f32.mrf.mxu0
    %v392 = vadd.f32 %v117, %v391
    %v393 = vpop.f32.mrf.mxu0
    %v394 = vpop.f32.mrf.mxu0
    %v395 = vadd.f32 %v118, %v394
    %v396 = vpop.f32.mrf.mxu0
    %397 = vdwg.mxu0
    %v398 = vsel %vm121, %v384, -inf
    %399 = vmax.xlane.f32.xlu0 %v398
    %v400 = vpop.xlane.xlu0 %399
    %v401 = vsel %vm121, %v387, -inf
    %402 = vmax.xlane.f32.xlu0 %v401
    %v403 = vpop.xlane.xlu0 %402
    %v404 = vsel %vm121, %v392, -inf
    %405 = vmax.xlane.f32.xlu0 %v404
    %v406 = vpop.xlane.xlu0 %405
    %v407 = vsel %vm121, %v395, -inf
    %408 = vmax.xlane.f32.xlu0 %v407
    %v409 = vpop.xlane.xlu0 %408
    %v410 = vsub.f32 %v384, %v400
    %v411 = vsub.f32 %v387, %v403
    %v412 = vsub.f32 %v392, %v406
    %v413 = vsub.f32 %v395, %v409
    %v414 = vmul.f32 %v410, 1.442695
    %v415 = vpow.pop %v414
    %v416 = vmul.f32 %v411, 1.442695
    %v417 = vpow.pop %v416
    %v418 = vmul.f32 %v412, 1.442695
    %v419 = vpow.pop %v418
    %v420 = vmul.f32 %v413, 1.442695
    %v421 = vpow.pop %v420
    %v422 = vsel %vm121, %v415, 0.0
    %423 = vadd.xlane.f32.xlu0 %v422
    %v424 = vpop.xlane.xlu0 %423
    %v425 = vsel %vm121, %v417, 0.0
    %426 = vadd.xlane.f32.xlu0 %v425
    %v427 = vpop.xlane.xlu0 %426
    %v428 = vsel %vm121, %v419, 0.0
    %429 = vadd.xlane.f32.xlu0 %v428
    %v430 = vpop.xlane.xlu0 %429
    %v431 = vsel %vm121, %v421, 0.0
    %432 = vadd.xlane.f32.xlu0 %v431
    %v433 = vpop.xlane.xlu0 %432
    %v434 = vrcp.pop %v424
    %v435 = vrcp.pop %v427
    %v436 = vrcp.pop %v430
    %v437 = vrcp.pop %v433
    %v438 = vmul.f32 %v415, %v434
    %v439 = vmul.f32 %v417, %v435
    %v440 = vmul.f32 %v419, %v436
    %v441 = vmul.f32 %v421, %v437
    %v442 = vld [vmem:[#allocation5] sm:$0xf]
    %v443 = vld [vmem:[#allocation5 + $0x4] sm:$0xf]
    %v444 = vld [vmem:[#allocation5 + $0x8] sm:$0xf]
    %v445 = vld [vmem:[#allocation5 + $0xc] sm:$0xf]
    %v450 = vunpack.c.l.b16 %v442
    %v451 = vunpack.c.l.b16 %v443
    %v452 = vunpack.c.l.b16 %v444
    %v453 = vunpack.c.l.b16 %v445
    %v454 = vpack.c.b16 %v451, %v450
    %v455 = vpack.c.b16 %v453, %v452
    %458 = vmatprep.subr.bf16.mxu0 0
    %459 = vmatpush1.bf16.msra.mxu0 0
    %460 = vmatprep.subr.bf16.mxu0 0
    %461 = vmatpush1.bf16.msra.mxu0 0
    %462 = vmatprep.subr.bf16.mxu0 0
    %463 = vmatpush1.bf16.msra.mxu0 0
    %464 = vmatprep.subr.bf16.mxu0 0
    %465 = vmatpush1.bf16.msra.mxu0 0
    %466 = vmatprep.subr.bf16.mxu0 0
    %467 = vmatpush1.bf16.msra.mxu0 0
    %468 = vmatprep.subr.bf16.mxu0 0
    %469 = vmatpush1.bf16.msra.mxu0 0
    %470 = vmatprep.subr.bf16.mxu0 0
    %471 = vmatpush1.bf16.msra.mxu0 %v455
    %472 = vmatprep.subr.bf16.mxu0 0
    %473 = vmatpush1.bf16.msra.mxu0 %v454
    %474 = vmatprep.subr.bf16.mxu0 0
    %475 = vmatpush2.bf16.msra.mxu0 0
    %476 = vmatprep.subr.bf16.mxu0 0
    %477 = vmatpush2.bf16.msra.mxu0 0
    %478 = vmatprep.subr.bf16.mxu0 0
    %479 = vmatpush2.bf16.msra.mxu0 0
    %480 = vmatprep.subr.bf16.mxu0 0
    %481 = vmatpush2.bf16.msra.mxu0 0
    %482 = vmatprep.subr.bf16.mxu0 0
    %483 = vmatpush2.bf16.msra.mxu0 0
    %484 = vmatprep.subr.bf16.mxu0 0
    %485 = vmatpush2.bf16.msra.mxu0 0
    %486 = vmatprep.subr.bf16.mxu0 0
    %487 = vmatpush2.bf16.msra.mxu0 0
    %488 = vmatprep.subr.bf16.mxu0 0
    %489 = vmatpush2.bf16.msra.mxu0 0
    %490 = vmatprep.mubr.bf16.mxu0 0
    %491 = vmatmul.mubr.bf16.gmra.mxu0 %v214
    %v492 = vpop.f32.mrf.mxu0
    %v493 = vadd.f32 0.0, %v492
    %v494 = vpop.f32.mrf.mxu0
    %v495 = vpop.f32.mrf.mxu0
    %v496 = vadd.f32 0.0, %v495
    %v497 = vpop.f32.mrf.mxu0
    %498 = vmatprep.mubr.bf16.mxu0 0
    %499 = vmatmul.mubr.bf16.gmra.mxu0 %v217
    %v500 = vpop.f32.mrf.mxu0
    %v501 = vadd.f32 0.0, %v500
    %v502 = vpop.f32.mrf.mxu0
    %v503 = vpop.f32.mrf.mxu0
    %v504 = vadd.f32 0.0, %v503
    %v505 = vpop.f32.mrf.mxu0
    %506 = vdwg.mxu0
    %v507 = vpack.c.bf16 %v439, %v438
    %v508 = vpack.c.bf16 %v441, %v440
    %v509 = vpack.c.bf16 %v496, %v493
    %v510 = vpack.c.bf16 %v504, %v501
    %s511 = scalar_lea.vmem %s5, 16
    %v512 = vld [vmem:[%s511] sm:$0xf]
    %v513 = vld [vmem:[%s511 + $0x4] sm:$0xf]
    %v514 = vld [vmem:[%s511 + $0x8] sm:$0xf]
    %v515 = vld [vmem:[%s511 + $0xc] sm:$0xf]
    %v520 = vunpack.c.l.b16 %v512
    %v521 = vunpack.c.l.b16 %v513
    %v522 = vunpack.c.l.b16 %v514
    %v523 = vunpack.c.l.b16 %v515
    %v524 = vpack.c.b16 %v521, %v520
    %v525 = vpack.c.b16 %v523, %v522
    %528 = vmatprep.subr.bf16.mxu0 0
    %529 = vmatpush1.bf16.msra.mxu0 0
    %530 = vmatprep.subr.bf16.mxu0 0
    %531 = vmatpush1.bf16.msra.mxu0 0
    %532 = vmatprep.subr.bf16.mxu0 0
    %533 = vmatpush1.bf16.msra.mxu0 0
    %534 = vmatprep.subr.bf16.mxu0 0
    %535 = vmatpush1.bf16.msra.mxu0 0
    %536 = vmatprep.subr.bf16.mxu0 0
    %537 = vmatpush1.bf16.msra.mxu0 0
    %538 = vmatprep.subr.bf16.mxu0 0
    %539 = vmatpush1.bf16.msra.mxu0 0
    %540 = vmatprep.subr.bf16.mxu0 0
    %541 = vmatpush1.bf16.msra.mxu0 %v525
    %542 = vmatprep.subr.bf16.mxu0 0
    %543 = vmatpush1.bf16.msra.mxu0 %v524
    %544 = vmatprep.subr.bf16.mxu0 0
    %545 = vmatpush2.bf16.msra.mxu0 0
    %546 = vmatprep.subr.bf16.mxu0 0
    %547 = vmatpush2.bf16.msra.mxu0 0
    %548 = vmatprep.subr.bf16.mxu0 0
    %549 = vmatpush2.bf16.msra.mxu0 0
    %550 = vmatprep.subr.bf16.mxu0 0
    %551 = vmatpush2.bf16.msra.mxu0 0
    %552 = vmatprep.subr.bf16.mxu0 0
    %553 = vmatpush2.bf16.msra.mxu0 0
    %554 = vmatprep.subr.bf16.mxu0 0
    %555 = vmatpush2.bf16.msra.mxu0 0
    %556 = vmatprep.subr.bf16.mxu0 0
    %557 = vmatpush2.bf16.msra.mxu0 0
    %558 = vmatprep.subr.bf16.mxu0 0
    %559 = vmatpush2.bf16.msra.mxu0 0
    %560 = vmatprep.mubr.bf16.mxu0 0
    %561 = vmatmul.mubr.bf16.gmra.mxu0 %v214
    %v562 = vpop.f32.mrf.mxu0
    %v563 = vadd.f32 0.0, %v562
    %v564 = vpop.f32.mrf.mxu0
    %v565 = vpop.f32.mrf.mxu0
    %v566 = vadd.f32 0.0, %v565
    %v567 = vpop.f32.mrf.mxu0
    %568 = vmatprep.mubr.bf16.mxu0 0
    %569 = vmatmul.mubr.bf16.gmra.mxu0 %v217
    %v570 = vpop.f32.mrf.mxu0
    %v571 = vadd.f32 0.0, %v570
    %v572 = vpop.f32.mrf.mxu0
    %v573 = vpop.f32.mrf.mxu0
    %v574 = vadd.f32 0.0, %v573
    %v575 = vpop.f32.mrf.mxu0
    %576 = vdwg.mxu0
    %v577 = vpack.c.bf16 %v566, %v563
    %v578 = vpack.c.bf16 %v574, %v571
    %v580 = vsel %vm121, %v577, 0
    %v583 = vsel %vm121, %v578, 0
    %585 = vmatprep.subr.bf16.mxu0 0
    %586 = vmatpush1.bf16.xpose.msra.mxu0 0
    %587 = vmatprep.subr.bf16.mxu0 0
    %588 = vmatpush1.bf16.xpose.msra.mxu0 0
    %589 = vmatprep.subr.bf16.mxu0 0
    %590 = vmatpush1.bf16.xpose.msra.mxu0 0
    %591 = vmatprep.subr.bf16.mxu0 0
    %592 = vmatpush1.bf16.xpose.msra.mxu0 0
    %593 = vmatprep.subr.bf16.mxu0 0
    %594 = vmatpush1.bf16.xpose.msra.mxu0 0
    %595 = vmatprep.subr.bf16.mxu0 0
    %596 = vmatpush1.bf16.xpose.msra.mxu0 0
    %597 = vmatprep.subr.bf16.mxu0 0
    %598 = vmatpush1.bf16.xpose.msra.mxu0 %v347
    %599 = vmatprep.subr.bf16.mxu0 0
    %600 = vmatpush1.bf16.xpose.msra.mxu0 %v344
    %601 = vmatprep.subr.bf16.mxu0 0
    %602 = vmatpush2.bf16.xpose.msra.mxu0 0
    %603 = vmatprep.subr.bf16.mxu0 0
    %604 = vmatpush2.bf16.xpose.msra.mxu0 0
    %605 = vmatprep.subr.bf16.mxu0 0
    %606 = vmatpush2.bf16.xpose.msra.mxu0 0
    %607 = vmatprep.subr.bf16.mxu0 0
    %608 = vmatpush2.bf16.xpose.msra.mxu0 0
    %609 = vmatprep.subr.bf16.mxu0 0
    %610 = vmatpush2.bf16.xpose.msra.mxu0 0
    %611 = vmatprep.subr.bf16.mxu0 0
    %612 = vmatpush2.bf16.xpose.msra.mxu0 0
    %613 = vmatprep.subr.bf16.mxu0 0
    %614 = vmatpush2.bf16.xpose.msra.mxu0 0
    %615 = vmatprep.subr.bf16.mxu0 0
    %616 = vmatpush2.bf16.xpose.msra.mxu0 0
    %617 = vmatprep.mubr.bf16.mxu0 0
    %618 = vmatmul.mubr.bf16.gmra.mxu0 %v580
    %v619 = vpop.f32.mrf.mxu0
    %v620 = vadd.f32 %v115, %v619
    %v621 = vpop.f32.mrf.mxu0
    %v622 = vpop.f32.mrf.mxu0
    %v623 = vadd.f32 %v116, %v622
    %v624 = vpop.f32.mrf.mxu0
    %625 = vmatprep.mubr.bf16.mxu0 0
    %626 = vmatmul.mubr.bf16.gmra.mxu0 %v583
    %v627 = vpop.f32.mrf.mxu0
    %v628 = vadd.f32 %v117, %v627
    %v629 = vpop.f32.mrf.mxu0
    %v630 = vpop.f32.mrf.mxu0
    %v631 = vadd.f32 %v118, %v630
    %v632 = vpop.f32.mrf.mxu0
    %633 = vdwg.mxu0
    %v634 = vsel %vm121, %v620, -inf
    %635 = vmax.xlane.f32.xlu0 %v634
    %v636 = vpop.xlane.xlu0 %635
    %v637 = vsel %vm121, %v623, -inf
    %638 = vmax.xlane.f32.xlu0 %v637
    %v639 = vpop.xlane.xlu0 %638
    %v640 = vsel %vm121, %v628, -inf
    %641 = vmax.xlane.f32.xlu0 %v640
    %v642 = vpop.xlane.xlu0 %641
    %v643 = vsel %vm121, %v631, -inf
    %644 = vmax.xlane.f32.xlu0 %v643
    %v645 = vpop.xlane.xlu0 %644
    %v646 = vsub.f32 %v620, %v636
    %v647 = vsub.f32 %v623, %v639
    %v648 = vsub.f32 %v628, %v642
    %v649 = vsub.f32 %v631, %v645
    %v650 = vmul.f32 %v646, 1.442695
    %v651 = vpow.pop %v650
    %v652 = vmul.f32 %v647, 1.442695
    %v653 = vpow.pop %v652
    %v654 = vmul.f32 %v648, 1.442695
    %v655 = vpow.pop %v654
    %v656 = vmul.f32 %v649, 1.442695
    %v657 = vpow.pop %v656
    %v658 = vsel %vm121, %v651, 0.0
    %659 = vadd.xlane.f32.xlu0 %v658
    %v660 = vpop.xlane.xlu0 %659
    %v661 = vsel %vm121, %v653, 0.0
    %662 = vadd.xlane.f32.xlu0 %v661
    %v663 = vpop.xlane.xlu0 %662
    %v664 = vsel %vm121, %v655, 0.0
    %665 = vadd.xlane.f32.xlu0 %v664
    %v666 = vpop.xlane.xlu0 %665
    %v667 = vsel %vm121, %v657, 0.0
    %668 = vadd.xlane.f32.xlu0 %v667
    %v669 = vpop.xlane.xlu0 %668
    %v670 = vrcp.pop %v660
    %v671 = vrcp.pop %v663
    %v672 = vrcp.pop %v666
    %v673 = vrcp.pop %v669
    %v674 = vmul.f32 %v651, %v670
    %v675 = vmul.f32 %v653, %v671
    %v676 = vmul.f32 %v655, %v672
    %v677 = vmul.f32 %v657, %v673
    %s678 = scalar_lea.vmem [#allocation5], 16
    %v679 = vld [vmem:[%s678] sm:$0xf]
    %v680 = vld [vmem:[%s678 + $0x4] sm:$0xf]
    %v681 = vld [vmem:[%s678 + $0x8] sm:$0xf]
    %v682 = vld [vmem:[%s678 + $0xc] sm:$0xf]
    %v687 = vunpack.c.l.b16 %v679
    %v688 = vunpack.c.l.b16 %v680
    %v689 = vunpack.c.l.b16 %v681
    %v690 = vunpack.c.l.b16 %v682
    %v691 = vpack.c.b16 %v688, %v687
    %v692 = vpack.c.b16 %v690, %v689
    %695 = vmatprep.subr.bf16.mxu0 0
    %696 = vmatpush1.bf16.msra.mxu0 0
    %697 = vmatprep.subr.bf16.mxu0 0
    %698 = vmatpush1.bf16.msra.mxu0 0
    %699 = vmatprep.subr.bf16.mxu0 0
    %700 = vmatpush1.bf16.msra.mxu0 0
    %701 = vmatprep.subr.bf16.mxu0 0
    %702 = vmatpush1.bf16.msra.mxu0 0
    %703 = vmatprep.subr.bf16.mxu0 0
    %704 = vmatpush1.bf16.msra.mxu0 0
    %705 = vmatprep.subr.bf16.mxu0 0
    %706 = vmatpush1.bf16.msra.mxu0 0
    %707 = vmatprep.subr.bf16.mxu0 0
    %708 = vmatpush1.bf16.msra.mxu0 %v692
    %709 = vmatprep.subr.bf16.mxu0 0
    %710 = vmatpush1.bf16.msra.mxu0 %v691
    %711 = vmatprep.subr.bf16.mxu0 0
    %712 = vmatpush2.bf16.msra.mxu0 0
    %713 = vmatprep.subr.bf16.mxu0 0
    %714 = vmatpush2.bf16.msra.mxu0 0
    %715 = vmatprep.subr.bf16.mxu0 0
    %716 = vmatpush2.bf16.msra.mxu0 0
    %717 = vmatprep.subr.bf16.mxu0 0
    %718 = vmatpush2.bf16.msra.mxu0 0
    %719 = vmatprep.subr.bf16.mxu0 0
    %720 = vmatpush2.bf16.msra.mxu0 0
    %721 = vmatprep.subr.bf16.mxu0 0
    %722 = vmatpush2.bf16.msra.mxu0 0
    %723 = vmatprep.subr.bf16.mxu0 0
    %724 = vmatpush2.bf16.msra.mxu0 0
    %725 = vmatprep.subr.bf16.mxu0 0
    %726 = vmatpush2.bf16.msra.mxu0 0
    %727 = vmatprep.mubr.bf16.mxu0 0
    %728 = vmatmul.mubr.bf16.gmra.mxu0 %v214
    %v729 = vpop.f32.mrf.mxu0
    %v730 = vadd.f32 0.0, %v729
    %v731 = vpop.f32.mrf.mxu0
    %v732 = vpop.f32.mrf.mxu0
    %v733 = vadd.f32 0.0, %v732
    %v734 = vpop.f32.mrf.mxu0
    %735 = vmatprep.mubr.bf16.mxu0 0
    %736 = vmatmul.mubr.bf16.gmra.mxu0 %v217
    %v737 = vpop.f32.mrf.mxu0
    %v738 = vadd.f32 0.0, %v737
    %v739 = vpop.f32.mrf.mxu0
    %v740 = vpop.f32.mrf.mxu0
    %v741 = vadd.f32 0.0, %v740
    %v742 = vpop.f32.mrf.mxu0
    %743 = vdwg.mxu0
    %v744 = vpack.c.bf16 %v675, %v674
    %v745 = vpack.c.bf16 %v677, %v676
    %v746 = vpack.c.bf16 %v733, %v730
    %v747 = vpack.c.bf16 %v741, %v738
    %v749 = vsel %vm121, %v744, 0
    %v752 = vsel %vm121, %v745, 0
    %754 = vmatprep.subr.bf16.mxu0 0
    %755 = vmatpush1.bf16.msra.mxu0 0
    %756 = vmatprep.subr.bf16.mxu0 0
    %757 = vmatpush1.bf16.msra.mxu0 0
    %758 = vmatprep.subr.bf16.mxu0 0
    %759 = vmatpush1.bf16.msra.mxu0 0
    %760 = vmatprep.subr.bf16.mxu0 0
    %761 = vmatpush1.bf16.msra.mxu0 0
    %762 = vmatprep.subr.bf16.mxu0 0
    %763 = vmatpush1.bf16.msra.mxu0 0
    %764 = vmatprep.subr.bf16.mxu0 0
    %765 = vmatpush1.bf16.msra.mxu0 0
    %766 = vmatprep.subr.bf16.mxu0 0
    %767 = vmatpush1.bf16.msra.mxu0 %v747
    %768 = vmatprep.subr.bf16.mxu0 0
    %769 = vmatpush1.bf16.msra.mxu0 %v746
    %770 = vmatprep.subr.bf16.mxu0 0
    %771 = vmatpush2.bf16.msra.mxu0 0
    %772 = vmatprep.subr.bf16.mxu0 0
    %773 = vmatpush2.bf16.msra.mxu0 0
    %774 = vmatprep.subr.bf16.mxu0 0
    %775 = vmatpush2.bf16.msra.mxu0 0
    %776 = vmatprep.subr.bf16.mxu0 0
    %777 = vmatpush2.bf16.msra.mxu0 0
    %778 = vmatprep.subr.bf16.mxu0 0
    %779 = vmatpush2.bf16.msra.mxu0 0
    %780 = vmatprep.subr.bf16.mxu0 0
    %781 = vmatpush2.bf16.msra.mxu0 0
    %782 = vmatprep.subr.bf16.mxu0 0
    %783 = vmatpush2.bf16.msra.mxu0 0
    %784 = vmatprep.subr.bf16.mxu0 0
    %785 = vmatpush2.bf16.msra.mxu0 0
    %786 = vmatprep.mubr.bf16.mxu0 0
    %787 = vmatmul.mubr.bf16.gmra.mxu0 %v749
    %v788 = vpop.f32.mrf.mxu0
    %v789 = vadd.f32 0.0, %v788
    %v790 = vpop.f32.mrf.mxu0
    %v791 = vpop.f32.mrf.mxu0
    %v792 = vadd.f32 0.0, %v791
    %v793 = vpop.f32.mrf.mxu0
    %794 = vmatprep.mubr.bf16.mxu0 0
    %795 = vmatmul.mubr.bf16.gmra.mxu0 %v752
    %v796 = vpop.f32.mrf.mxu0
    %v797 = vadd.f32 0.0, %v796
    %v798 = vpop.f32.mrf.mxu0
    %v799 = vpop.f32.mrf.mxu0
    %v800 = vadd.f32 0.0, %v799
    %v801 = vpop.f32.mrf.mxu0
    %802 = vdwg.mxu0
    %v804 = vsel %vm121, %v507, 0
    %v807 = vsel %vm121, %v508, 0
    %809 = vmatprep.subr.bf16.mxu0 0
    %810 = vmatpush1.bf16.msra.mxu0 0
    %811 = vmatprep.subr.bf16.mxu0 0
    %812 = vmatpush1.bf16.msra.mxu0 0
    %813 = vmatprep.subr.bf16.mxu0 0
    %814 = vmatpush1.bf16.msra.mxu0 0
    %815 = vmatprep.subr.bf16.mxu0 0
    %816 = vmatpush1.bf16.msra.mxu0 0
    %817 = vmatprep.subr.bf16.mxu0 0
    %818 = vmatpush1.bf16.msra.mxu0 0
    %819 = vmatprep.subr.bf16.mxu0 0
    %820 = vmatpush1.bf16.msra.mxu0 0
    %821 = vmatprep.subr.bf16.mxu0 0
    %822 = vmatpush1.bf16.msra.mxu0 %v510
    %823 = vmatprep.subr.bf16.mxu0 0
    %824 = vmatpush1.bf16.msra.mxu0 %v509
    %825 = vmatprep.subr.bf16.mxu0 0
    %826 = vmatpush2.bf16.msra.mxu0 0
    %827 = vmatprep.subr.bf16.mxu0 0
    %828 = vmatpush2.bf16.msra.mxu0 0
    %829 = vmatprep.subr.bf16.mxu0 0
    %830 = vmatpush2.bf16.msra.mxu0 0
    %831 = vmatprep.subr.bf16.mxu0 0
    %832 = vmatpush2.bf16.msra.mxu0 0
    %833 = vmatprep.subr.bf16.mxu0 0
    %834 = vmatpush2.bf16.msra.mxu0 0
    %835 = vmatprep.subr.bf16.mxu0 0
    %836 = vmatpush2.bf16.msra.mxu0 0
    %837 = vmatprep.subr.bf16.mxu0 0
    %838 = vmatpush2.bf16.msra.mxu0 0
    %839 = vmatprep.subr.bf16.mxu0 0
    %840 = vmatpush2.bf16.msra.mxu0 0
    %841 = vmatprep.mubr.bf16.mxu0 0
    %842 = vmatmul.mubr.bf16.gmra.mxu0 %v804
    %v843 = vpop.f32.mrf.mxu0
    %v844 = vadd.f32 %v789, %v843
    %v845 = vpop.f32.mrf.mxu0
    %v846 = vpop.f32.mrf.mxu0
    %v847 = vadd.f32 %v792, %v846
    %v848 = vpop.f32.mrf.mxu0
    %849 = vmatprep.mubr.bf16.mxu0 0
    %850 = vmatmul.mubr.bf16.gmra.mxu0 %v807
    %v851 = vpop.f32.mrf.mxu0
    %v852 = vadd.f32 %v797, %v851
    %v853 = vpop.f32.mrf.mxu0
    %v854 = vpop.f32.mrf.mxu0
    %v855 = vadd.f32 %v800, %v854
    %v856 = vpop.f32.mrf.mxu0
    %857 = vdwg.mxu0
    %v858 = vadd.f32 %v107, %v844
    %v859 = vadd.f32 %v108, %v847
    %v860 = vadd.f32 %v109, %v852
    %v861 = vadd.f32 %v110, %v855
    %863 = vset.pattern.permute.xlu0 0
    %864 = vperm.xlu0 %863, %v111
    %v865 = vpop.permute.xlu0 %864
    %868 = vset.pattern.permute.xlu0 0
    %869 = vperm.xlu0 %868, %v112
    %v870 = vpop.permute.xlu0 %869
    %873 = vset.pattern.permute.xlu0 0
    %874 = vperm.xlu0 %873, %v113
    %v875 = vpop.permute.xlu0 %874
    %878 = vset.pattern.permute.xlu0 0
    %879 = vperm.xlu0 %878, %v114
    %v880 = vpop.permute.xlu0 %879
    %v882 = vmul.f32 %v858, %v865
    %v883 = vmul.f32 %v859, %v870
    %v884 = vmul.f32 %v860, %v875
    %v885 = vmul.f32 %v861, %v880
    %v886 = vld [vmem:[%s8] sm:$0x1]
    %v887 = vld [vmem:[%s9] sm:$0x1]
    %v888 = vsel %vm121, %v882, 0.0
    %889 = vadd.xlane.f32.xlu0 %v888
    %v890 = vpop.xlane.xlu0 %889
    %v891 = vsel %vm121, %v883, 0.0
    %892 = vadd.xlane.f32.xlu0 %v891
    %v893 = vpop.xlane.xlu0 %892
    %v894 = vsel %vm121, %v884, 0.0
    %895 = vadd.xlane.f32.xlu0 %v894
    %v896 = vpop.xlane.xlu0 %895
    %v897 = vsel %vm121, %v885, 0.0
    %898 = vadd.xlane.f32.xlu0 %v897
    %v899 = vpop.xlane.xlu0 %898
    %v900 = vmul.f32 %v890, %v134
    %v901 = vmul.f32 %v893, %v134
    %v902 = vmul.f32 %v896, %v134
    %v903 = vmul.f32 %v899, %v134
    %v904 = vsub.f32 %v882, %v900
    %v905 = vsub.f32 %v883, %v901
    %v906 = vsub.f32 %v884, %v902
    %v907 = vsub.f32 %v885, %v903
    %v908 = vmul.f32 %v904, %v904
    %v909 = vmul.f32 %v905, %v905
    %v910 = vmul.f32 %v906, %v906
    %v911 = vmul.f32 %v907, %v907
    %v912 = vsel %vm121, %v908, 0.0
    %913 = vadd.xlane.f32.xlu0 %v912
    %v914 = vpop.xlane.xlu0 %913
    %v915 = vsel %vm121, %v909, 0.0
    %916 = vadd.xlane.f32.xlu0 %v915
    %v917 = vpop.xlane.xlu0 %916
    %v918 = vsel %vm121, %v910, 0.0
    %919 = vadd.xlane.f32.xlu0 %v918
    %v920 = vpop.xlane.xlu0 %919
    %v921 = vsel %vm121, %v911, 0.0
    %922 = vadd.xlane.f32.xlu0 %v921
    %v923 = vpop.xlane.xlu0 %922
    %v924 = vmul.f32 %v914, %v134
    %v925 = vmul.f32 %v917, %v134
    %v926 = vmul.f32 %v920, %v134
    %v927 = vmul.f32 %v923, %v134
    %v928 = vadd.f32 %v924, 1e-12
    %v929 = vadd.f32 %v925, 1e-12
    %v930 = vadd.f32 %v926, 1e-12
    %v931 = vadd.f32 %v927, 1e-12
    %v932 = vrsqrt.pop %v928
    %v933 = vrsqrt.pop %v929
    %v934 = vrsqrt.pop %v930
    %v935 = vrsqrt.pop %v931
    %v936 = vmul.f32 %v904, %v932
    %v937 = vmul.f32 %v905, %v933
    %v938 = vmul.f32 %v906, %v934
    %v939 = vmul.f32 %v907, %v935
    %v941 = vlaneseq
    %v942 = vshrl.u32 %v941, 7
    %v943 = vsub.s32 0, %v942
    %v944 = vrot.slane %v886, %v943
    %v946 = vmul.f32 %v936, %v944
    %v947 = vmul.f32 %v937, %v944
    %v948 = vmul.f32 %v938, %v944
    %v949 = vmul.f32 %v939, %v944
    %v951 = vlaneseq
    %v952 = vshrl.u32 %v951, 7
    %v953 = vsub.s32 0, %v952
    %v954 = vrot.slane %v887, %v953
    %v956 = vadd.f32 %v946, %v954
    %v957 = vadd.f32 %v947, %v954
    %v958 = vadd.f32 %v948, %v954
    %v959 = vadd.f32 %v949, %v954
    %v960 = vpack.c.bf16 %v957, %v956
    %v961 = vpack.c.bf16 %v959, %v958
    %v962 = vld [vmem:[#allocation7] sm:$0xf]
    %v963 = vld [vmem:[#allocation7 + $0x4] sm:$0xf]
    %v964 = vld [vmem:[#allocation7 + $0x8] sm:$0xf]
    %v965 = vld [vmem:[#allocation7 + $0xc] sm:$0xf]
    %v970 = vunpack.c.l.b16 %v962
    %v971 = vunpack.c.l.b16 %v963
    %v972 = vunpack.c.l.b16 %v964
    %v973 = vunpack.c.l.b16 %v965
    %v974 = vpack.c.b16 %v971, %v970
    %v975 = vpack.c.b16 %v973, %v972
    %v977 = vsel %vm121, %v974, 0
    %v980 = vsel %vm121, %v975, 0
    %982 = vmatprep.subr.bf16.mxu0 0
    %983 = vmatpush1.bf16.msra.mxu0 0
    %984 = vmatprep.subr.bf16.mxu0 0
    %985 = vmatpush1.bf16.msra.mxu0 0
    %986 = vmatprep.subr.bf16.mxu0 0
    %987 = vmatpush1.bf16.msra.mxu0 0
    %988 = vmatprep.subr.bf16.mxu0 0
    %989 = vmatpush1.bf16.msra.mxu0 0
    %990 = vmatprep.subr.bf16.mxu0 0
    %991 = vmatpush1.bf16.msra.mxu0 0
    %992 = vmatprep.subr.bf16.mxu0 0
    %993 = vmatpush1.bf16.msra.mxu0 0
    %994 = vmatprep.subr.bf16.mxu0 0
    %995 = vmatpush1.bf16.msra.mxu0 %v961
    %996 = vmatprep.subr.bf16.mxu0 0
    %997 = vmatpush1.bf16.msra.mxu0 %v960
    %998 = vmatprep.subr.bf16.mxu0 0
    %999 = vmatpush2.bf16.msra.mxu0 0
    %1000 = vmatprep.subr.bf16.mxu0 0
    %1001 = vmatpush2.bf16.msra.mxu0 0
    %1002 = vmatprep.subr.bf16.mxu0 0
    %1003 = vmatpush2.bf16.msra.mxu0 0
    %1004 = vmatprep.subr.bf16.mxu0 0
    %1005 = vmatpush2.bf16.msra.mxu0 0
    %1006 = vmatprep.subr.bf16.mxu0 0
    %1007 = vmatpush2.bf16.msra.mxu0 0
    %1008 = vmatprep.subr.bf16.mxu0 0
    %1009 = vmatpush2.bf16.msra.mxu0 0
    %1010 = vmatprep.subr.bf16.mxu0 0
    %1011 = vmatpush2.bf16.msra.mxu0 0
    %1012 = vmatprep.subr.bf16.mxu0 0
    %1013 = vmatpush2.bf16.msra.mxu0 0
    %1014 = vmatprep.mubr.bf16.mxu0 0
    %1015 = vmatmul.mubr.bf16.gmra.mxu0 %v977
    %v1016 = vpop.f32.mrf.mxu0
    %v1017 = vadd.f32 0.0, %v1016
    %v1018 = vpop.f32.mrf.mxu0
    %v1019 = vpop.f32.mrf.mxu0
    %v1020 = vadd.f32 0.0, %v1019
    %v1021 = vpop.f32.mrf.mxu0
    %1022 = vmatprep.mubr.bf16.mxu0 0
    %1023 = vmatmul.mubr.bf16.gmra.mxu0 %v980
    %v1024 = vpop.f32.mrf.mxu0
    %v1025 = vadd.f32 0.0, %v1024
    %v1026 = vpop.f32.mrf.mxu0
    %v1027 = vpop.f32.mrf.mxu0
    %v1028 = vadd.f32 0.0, %v1027
    %v1029 = vpop.f32.mrf.mxu0
    %1030 = vdwg.mxu0
    %v1031 = vpack.c.bf16 %v1020, %v1017
    %v1032 = vpack.c.bf16 %v1028, %v1025
    %v1033 = vld [vmem:[#allocation8] sm:$0xf]
    %v1034 = vld [vmem:[#allocation8 + $0x4] sm:$0xf]
    %v1035 = vld [vmem:[#allocation8 + $0x8] sm:$0xf]
    %v1036 = vld [vmem:[#allocation8 + $0xc] sm:$0xf]
    %s1037 = scalar_lea.vmem [#allocation7], 16
    %v1038 = vld [vmem:[%s1037] sm:$0xf]
    %v1039 = vld [vmem:[%s1037 + $0x4] sm:$0xf]
    %v1040 = vld [vmem:[%s1037 + $0x8] sm:$0xf]
    %v1041 = vld [vmem:[%s1037 + $0xc] sm:$0xf]
    %v1046 = vunpack.c.l.b16 %v1038
    %v1047 = vunpack.c.l.b16 %v1039
    %v1048 = vunpack.c.l.b16 %v1040
    %v1049 = vunpack.c.l.b16 %v1041
    %v1050 = vpack.c.b16 %v1047, %v1046
    %v1051 = vpack.c.b16 %v1049, %v1048
    %v1053 = vsel %vm121, %v1050, 0
    %v1056 = vsel %vm121, %v1051, 0
    %1058 = vmatprep.subr.bf16.mxu0 0
    %1059 = vmatpush1.bf16.msra.mxu0 0
    %1060 = vmatprep.subr.bf16.mxu0 0
    %1061 = vmatpush1.bf16.msra.mxu0 0
    %1062 = vmatprep.subr.bf16.mxu0 0
    %1063 = vmatpush1.bf16.msra.mxu0 0
    %1064 = vmatprep.subr.bf16.mxu0 0
    %1065 = vmatpush1.bf16.msra.mxu0 0
    %1066 = vmatprep.subr.bf16.mxu0 0
    %1067 = vmatpush1.bf16.msra.mxu0 0
    %1068 = vmatprep.subr.bf16.mxu0 0
    %1069 = vmatpush1.bf16.msra.mxu0 0
    %1070 = vmatprep.subr.bf16.mxu0 0
    %1071 = vmatpush1.bf16.msra.mxu0 %v961
    %1072 = vmatprep.subr.bf16.mxu0 0
    %1073 = vmatpush1.bf16.msra.mxu0 %v960
    %1074 = vmatprep.subr.bf16.mxu0 0
    %1075 = vmatpush2.bf16.msra.mxu0 0
    %1076 = vmatprep.subr.bf16.mxu0 0
    %1077 = vmatpush2.bf16.msra.mxu0 0
    %1078 = vmatprep.subr.bf16.mxu0 0
    %1079 = vmatpush2.bf16.msra.mxu0 0
    %1080 = vmatprep.subr.bf16.mxu0 0
    %1081 = vmatpush2.bf16.msra.mxu0 0
    %1082 = vmatprep.subr.bf16.mxu0 0
    %1083 = vmatpush2.bf16.msra.mxu0 0
    %1084 = vmatprep.subr.bf16.mxu0 0
    %1085 = vmatpush2.bf16.msra.mxu0 0
    %1086 = vmatprep.subr.bf16.mxu0 0
    %1087 = vmatpush2.bf16.msra.mxu0 0
    %1088 = vmatprep.subr.bf16.mxu0 0
    %1089 = vmatpush2.bf16.msra.mxu0 0
    %1090 = vmatprep.mubr.bf16.mxu0 0
    %1091 = vmatmul.mubr.bf16.gmra.mxu0 %v1053
    %v1092 = vpop.f32.mrf.mxu0
    %v1093 = vadd.f32 0.0, %v1092
    %v1094 = vpop.f32.mrf.mxu0
    %v1095 = vpop.f32.mrf.mxu0
    %v1096 = vadd.f32 0.0, %v1095
    %v1097 = vpop.f32.mrf.mxu0
    %1098 = vmatprep.mubr.bf16.mxu0 0
    %1099 = vmatmul.mubr.bf16.gmra.mxu0 %v1056
    %v1100 = vpop.f32.mrf.mxu0
    %v1101 = vadd.f32 0.0, %v1100
    %v1102 = vpop.f32.mrf.mxu0
    %v1103 = vpop.f32.mrf.mxu0
    %v1104 = vadd.f32 0.0, %v1103
    %v1105 = vpop.f32.mrf.mxu0
    %1106 = vdwg.mxu0
    %v1107 = vpack.c.bf16 %v1096, %v1093
    %v1108 = vpack.c.bf16 %v1104, %v1101
    %s1109 = scalar_lea.vmem [#allocation8], 16
    %v1110 = vld [vmem:[%s1109] sm:$0xf]
    %v1111 = vld [vmem:[%s1109 + $0x4] sm:$0xf]
    %v1112 = vld [vmem:[%s1109 + $0x8] sm:$0xf]
    %v1113 = vld [vmem:[%s1109 + $0xc] sm:$0xf]
    %v1118 = vunpack.c.l.b16 %v1110
    %v1119 = vunpack.c.l.b16 %v1111
    %v1120 = vunpack.c.l.b16 %v1112
    %v1121 = vunpack.c.l.b16 %v1113
    %v1122 = vpack.c.b16 %v1119, %v1118
    %v1123 = vpack.c.b16 %v1121, %v1120
    %v1127 = vsel %vm121, %v1107, 0
    %v1130 = vsel %vm121, %v1108, 0
    %1132 = vmatprep.subr.bf16.mxu0 0
    %1133 = vmatpush1.bf16.msra.mxu0 0
    %1134 = vmatprep.subr.bf16.mxu0 0
    %1135 = vmatpush1.bf16.msra.mxu0 0
    %1136 = vmatprep.subr.bf16.mxu0 0
    %1137 = vmatpush1.bf16.msra.mxu0 0
    %1138 = vmatprep.subr.bf16.mxu0 0
    %1139 = vmatpush1.bf16.msra.mxu0 0
    %1140 = vmatprep.subr.bf16.mxu0 0
    %1141 = vmatpush1.bf16.msra.mxu0 0
    %1142 = vmatprep.subr.bf16.mxu0 0
    %1143 = vmatpush1.bf16.msra.mxu0 0
    %1144 = vmatprep.subr.bf16.mxu0 0
    %1145 = vmatpush1.bf16.msra.mxu0 %v1123
    %1146 = vmatprep.subr.bf16.mxu0 0
    %1147 = vmatpush1.bf16.msra.mxu0 %v1122
    %1148 = vmatprep.subr.bf16.mxu0 0
    %1149 = vmatpush2.bf16.msra.mxu0 0
    %1150 = vmatprep.subr.bf16.mxu0 0
    %1151 = vmatpush2.bf16.msra.mxu0 0
    %1152 = vmatprep.subr.bf16.mxu0 0
    %1153 = vmatpush2.bf16.msra.mxu0 0
    %1154 = vmatprep.subr.bf16.mxu0 0
    %1155 = vmatpush2.bf16.msra.mxu0 0
    %1156 = vmatprep.subr.bf16.mxu0 0
    %1157 = vmatpush2.bf16.msra.mxu0 0
    %1158 = vmatprep.subr.bf16.mxu0 0
    %1159 = vmatpush2.bf16.msra.mxu0 0
    %1160 = vmatprep.subr.bf16.mxu0 0
    %1161 = vmatpush2.bf16.msra.mxu0 0
    %1162 = vmatprep.subr.bf16.mxu0 0
    %1163 = vmatpush2.bf16.msra.mxu0 0
    %1164 = vmatprep.mubr.bf16.mxu0 0
    %1165 = vmatmul.mubr.bf16.gmra.mxu0 %v1127
    %v1166 = vpop.f32.mrf.mxu0
    %v1167 = vadd.f32 0.0, %v1166
    %v1168 = vpop.f32.mrf.mxu0
    %v1169 = vpop.f32.mrf.mxu0
    %v1170 = vadd.f32 0.0, %v1169
    %v1171 = vpop.f32.mrf.mxu0
    %1172 = vmatprep.mubr.bf16.mxu0 0
    %1173 = vmatmul.mubr.bf16.gmra.mxu0 %v1130
    %v1174 = vpop.f32.mrf.mxu0
    %v1175 = vadd.f32 0.0, %v1174
    %v1176 = vpop.f32.mrf.mxu0
    %v1177 = vpop.f32.mrf.mxu0
    %v1178 = vadd.f32 0.0, %v1177
    %v1179 = vpop.f32.mrf.mxu0
    %1180 = vdwg.mxu0
    %v1185 = vunpack.c.l.b16 %v1033
    %v1186 = vunpack.c.l.b16 %v1034
    %v1187 = vunpack.c.l.b16 %v1035
    %v1188 = vunpack.c.l.b16 %v1036
    %v1189 = vpack.c.b16 %v1186, %v1185
    %v1190 = vpack.c.b16 %v1188, %v1187
    %v1194 = vsel %vm121, %v1031, 0
    %v1197 = vsel %vm121, %v1032, 0
    %1199 = vmatprep.subr.bf16.mxu0 0
    %1200 = vmatpush1.bf16.msra.mxu0 0
    %1201 = vmatprep.subr.bf16.mxu0 0
    %1202 = vmatpush1.bf16.msra.mxu0 0
    %1203 = vmatprep.subr.bf16.mxu0 0
    %1204 = vmatpush1.bf16.msra.mxu0 0
    %1205 = vmatprep.subr.bf16.mxu0 0
    %1206 = vmatpush1.bf16.msra.mxu0 0
    %1207 = vmatprep.subr.bf16.mxu0 0
    %1208 = vmatpush1.bf16.msra.mxu0 0
    %1209 = vmatprep.subr.bf16.mxu0 0
    %1210 = vmatpush1.bf16.msra.mxu0 0
    %1211 = vmatprep.subr.bf16.mxu0 0
    %1212 = vmatpush1.bf16.msra.mxu0 %v1190
    %1213 = vmatprep.subr.bf16.mxu0 0
    %1214 = vmatpush1.bf16.msra.mxu0 %v1189
    %1215 = vmatprep.subr.bf16.mxu0 0
    %1216 = vmatpush2.bf16.msra.mxu0 0
    %1217 = vmatprep.subr.bf16.mxu0 0
    %1218 = vmatpush2.bf16.msra.mxu0 0
    %1219 = vmatprep.subr.bf16.mxu0 0
    %1220 = vmatpush2.bf16.msra.mxu0 0
    %1221 = vmatprep.subr.bf16.mxu0 0
    %1222 = vmatpush2.bf16.msra.mxu0 0
    %1223 = vmatprep.subr.bf16.mxu0 0
    %1224 = vmatpush2.bf16.msra.mxu0 0
    %1225 = vmatprep.subr.bf16.mxu0 0
    %1226 = vmatpush2.bf16.msra.mxu0 0
    %1227 = vmatprep.subr.bf16.mxu0 0
    %1228 = vmatpush2.bf16.msra.mxu0 0
    %1229 = vmatprep.subr.bf16.mxu0 0
    %1230 = vmatpush2.bf16.msra.mxu0 0
    %1231 = vmatprep.mubr.bf16.mxu0 0
    %1232 = vmatmul.mubr.bf16.gmra.mxu0 %v1194
    %v1233 = vpop.f32.mrf.mxu0
    %v1234 = vadd.f32 %v1167, %v1233
    %v1235 = vpop.f32.mrf.mxu0
    %v1236 = vpop.f32.mrf.mxu0
    %v1237 = vadd.f32 %v1170, %v1236
    %v1238 = vpop.f32.mrf.mxu0
    %1239 = vmatprep.mubr.bf16.mxu0 0
    %1240 = vmatmul.mubr.bf16.gmra.mxu0 %v1197
    %v1241 = vpop.f32.mrf.mxu0
    %v1242 = vadd.f32 %v1175, %v1241
    %v1243 = vpop.f32.mrf.mxu0
    %v1244 = vpop.f32.mrf.mxu0
    %v1245 = vadd.f32 %v1178, %v1244
    %v1246 = vpop.f32.mrf.mxu0
    %1247 = vdwg.mxu0
    %s1248 = scalar_lea.vmem [#allocation7], 32
    %v1249 = vld [vmem:[%s1248] sm:$0xf]
    %v1250 = vld [vmem:[%s1248 + $0x4] sm:$0xf]
    %v1251 = vld [vmem:[%s1248 + $0x8] sm:$0xf]
    %v1252 = vld [vmem:[%s1248 + $0xc] sm:$0xf]
    %v1257 = vunpack.c.l.b16 %v1249
    %v1258 = vunpack.c.l.b16 %v1250
    %v1259 = vunpack.c.l.b16 %v1251
    %v1260 = vunpack.c.l.b16 %v1252
    %v1261 = vpack.c.b16 %v1258, %v1257
    %v1262 = vpack.c.b16 %v1260, %v1259
    %v1264 = vsel %vm121, %v1261, 0
    %v1267 = vsel %vm121, %v1262, 0
    %1269 = vmatprep.subr.bf16.mxu0 0
    %1270 = vmatpush1.bf16.msra.mxu0 0
    %1271 = vmatprep.subr.bf16.mxu0 0
    %1272 = vmatpush1.bf16.msra.mxu0 0
    %1273 = vmatprep.subr.bf16.mxu0 0
    %1274 = vmatpush1.bf16.msra.mxu0 0
    %1275 = vmatprep.subr.bf16.mxu0 0
    %1276 = vmatpush1.bf16.msra.mxu0 0
    %1277 = vmatprep.subr.bf16.mxu0 0
    %1278 = vmatpush1.bf16.msra.mxu0 0
    %1279 = vmatprep.subr.bf16.mxu0 0
    %1280 = vmatpush1.bf16.msra.mxu0 0
    %1281 = vmatprep.subr.bf16.mxu0 0
    %1282 = vmatpush1.bf16.msra.mxu0 %v961
    %1283 = vmatprep.subr.bf16.mxu0 0
    %1284 = vmatpush1.bf16.msra.mxu0 %v960
    %1285 = vmatprep.subr.bf16.mxu0 0
    %1286 = vmatpush2.bf16.msra.mxu0 0
    %1287 = vmatprep.subr.bf16.mxu0 0
    %1288 = vmatpush2.bf16.msra.mxu0 0
    %1289 = vmatprep.subr.bf16.mxu0 0
    %1290 = vmatpush2.bf16.msra.mxu0 0
    %1291 = vmatprep.subr.bf16.mxu0 0
    %1292 = vmatpush2.bf16.msra.mxu0 0
    %1293 = vmatprep.subr.bf16.mxu0 0
    %1294 = vmatpush2.bf16.msra.mxu0 0
    %1295 = vmatprep.subr.bf16.mxu0 0
    %1296 = vmatpush2.bf16.msra.mxu0 0
    %1297 = vmatprep.subr.bf16.mxu0 0
    %1298 = vmatpush2.bf16.msra.mxu0 0
    %1299 = vmatprep.subr.bf16.mxu0 0
    %1300 = vmatpush2.bf16.msra.mxu0 0
    %1301 = vmatprep.mubr.bf16.mxu0 0
    %1302 = vmatmul.mubr.bf16.gmra.mxu0 %v1264
    %v1303 = vpop.f32.mrf.mxu0
    %v1304 = vadd.f32 0.0, %v1303
    %v1305 = vpop.f32.mrf.mxu0
    %v1306 = vpop.f32.mrf.mxu0
    %v1307 = vadd.f32 0.0, %v1306
    %v1308 = vpop.f32.mrf.mxu0
    %1309 = vmatprep.mubr.bf16.mxu0 0
    %1310 = vmatmul.mubr.bf16.gmra.mxu0 %v1267
    %v1311 = vpop.f32.mrf.mxu0
    %v1312 = vadd.f32 0.0, %v1311
    %v1313 = vpop.f32.mrf.mxu0
    %v1314 = vpop.f32.mrf.mxu0
    %v1315 = vadd.f32 0.0, %v1314
    %v1316 = vpop.f32.mrf.mxu0
    %1317 = vdwg.mxu0
    %v1318 = vpack.c.bf16 %v1307, %v1304
    %v1319 = vpack.c.bf16 %v1315, %v1312
    %s1320 = scalar_lea.vmem [#allocation8], 32
    %v1321 = vld [vmem:[%s1320] sm:$0xf]
    %v1322 = vld [vmem:[%s1320 + $0x4] sm:$0xf]
    %v1323 = vld [vmem:[%s1320 + $0x8] sm:$0xf]
    %v1324 = vld [vmem:[%s1320 + $0xc] sm:$0xf]
    %v1329 = vunpack.c.l.b16 %v1321
    %v1330 = vunpack.c.l.b16 %v1322
    %v1331 = vunpack.c.l.b16 %v1323
    %v1332 = vunpack.c.l.b16 %v1324
    %v1333 = vpack.c.b16 %v1330, %v1329
    %v1334 = vpack.c.b16 %v1332, %v1331
    %v1338 = vsel %vm121, %v1318, 0
    %v1341 = vsel %vm121, %v1319, 0
    %1343 = vmatprep.subr.bf16.mxu0 0
    %1344 = vmatpush1.bf16.msra.mxu0 0
    %1345 = vmatprep.subr.bf16.mxu0 0
    %1346 = vmatpush1.bf16.msra.mxu0 0
    %1347 = vmatprep.subr.bf16.mxu0 0
    %1348 = vmatpush1.bf16.msra.mxu0 0
    %1349 = vmatprep.subr.bf16.mxu0 0
    %1350 = vmatpush1.bf16.msra.mxu0 0
    %1351 = vmatprep.subr.bf16.mxu0 0
    %1352 = vmatpush1.bf16.msra.mxu0 0
    %1353 = vmatprep.subr.bf16.mxu0 0
    %1354 = vmatpush1.bf16.msra.mxu0 0
    %1355 = vmatprep.subr.bf16.mxu0 0
    %1356 = vmatpush1.bf16.msra.mxu0 %v1334
    %1357 = vmatprep.subr.bf16.mxu0 0
    %1358 = vmatpush1.bf16.msra.mxu0 %v1333
    %1359 = vmatprep.subr.bf16.mxu0 0
    %1360 = vmatpush2.bf16.msra.mxu0 0
    %1361 = vmatprep.subr.bf16.mxu0 0
    %1362 = vmatpush2.bf16.msra.mxu0 0
    %1363 = vmatprep.subr.bf16.mxu0 0
    %1364 = vmatpush2.bf16.msra.mxu0 0
    %1365 = vmatprep.subr.bf16.mxu0 0
    %1366 = vmatpush2.bf16.msra.mxu0 0
    %1367 = vmatprep.subr.bf16.mxu0 0
    %1368 = vmatpush2.bf16.msra.mxu0 0
    %1369 = vmatprep.subr.bf16.mxu0 0
    %1370 = vmatpush2.bf16.msra.mxu0 0
    %1371 = vmatprep.subr.bf16.mxu0 0
    %1372 = vmatpush2.bf16.msra.mxu0 0
    %1373 = vmatprep.subr.bf16.mxu0 0
    %1374 = vmatpush2.bf16.msra.mxu0 0
    %1375 = vmatprep.mubr.bf16.mxu0 0
    %1376 = vmatmul.mubr.bf16.gmra.mxu0 %v1338
    %v1377 = vpop.f32.mrf.mxu0
    %v1378 = vadd.f32 0.0, %v1377
    %v1379 = vpop.f32.mrf.mxu0
    %v1380 = vpop.f32.mrf.mxu0
    %v1381 = vadd.f32 0.0, %v1380
    %v1382 = vpop.f32.mrf.mxu0
    %1383 = vmatprep.mubr.bf16.mxu0 0
    %1384 = vmatmul.mubr.bf16.gmra.mxu0 %v1341
    %v1385 = vpop.f32.mrf.mxu0
    %v1386 = vadd.f32 0.0, %v1385
    %v1387 = vpop.f32.mrf.mxu0
    %v1388 = vpop.f32.mrf.mxu0
    %v1389 = vadd.f32 0.0, %v1388
    %v1390 = vpop.f32.mrf.mxu0
    %1391 = vdwg.mxu0
    %v1392 = vadd.f32 %v1234, %v1378
    %v1393 = vadd.f32 %v1237, %v1381
    %v1394 = vadd.f32 %v1242, %v1386
    %v1395 = vadd.f32 %v1245, %v1389
    %s1396 = scalar_lea.vmem [#allocation7], 48
    %v1397 = vld [vmem:[%s1396] sm:$0xf]
    %v1398 = vld [vmem:[%s1396 + $0x4] sm:$0xf]
    %v1399 = vld [vmem:[%s1396 + $0x8] sm:$0xf]
    %v1400 = vld [vmem:[%s1396 + $0xc] sm:$0xf]
    %v1405 = vunpack.c.l.b16 %v1397
    %v1406 = vunpack.c.l.b16 %v1398
    %v1407 = vunpack.c.l.b16 %v1399
    %v1408 = vunpack.c.l.b16 %v1400
    %v1409 = vpack.c.b16 %v1406, %v1405
    %v1410 = vpack.c.b16 %v1408, %v1407
    %v1412 = vsel %vm121, %v1409, 0
    %v1415 = vsel %vm121, %v1410, 0
    %1417 = vmatprep.subr.bf16.mxu0 0
    %1418 = vmatpush1.bf16.msra.mxu0 0
    %1419 = vmatprep.subr.bf16.mxu0 0
    %1420 = vmatpush1.bf16.msra.mxu0 0
    %1421 = vmatprep.subr.bf16.mxu0 0
    %1422 = vmatpush1.bf16.msra.mxu0 0
    %1423 = vmatprep.subr.bf16.mxu0 0
    %1424 = vmatpush1.bf16.msra.mxu0 0
    %1425 = vmatprep.subr.bf16.mxu0 0
    %1426 = vmatpush1.bf16.msra.mxu0 0
    %1427 = vmatprep.subr.bf16.mxu0 0
    %1428 = vmatpush1.bf16.msra.mxu0 0
    %1429 = vmatprep.subr.bf16.mxu0 0
    %1430 = vmatpush1.bf16.msra.mxu0 %v961
    %1431 = vmatprep.subr.bf16.mxu0 0
    %1432 = vmatpush1.bf16.msra.mxu0 %v960
    %1433 = vmatprep.subr.bf16.mxu0 0
    %1434 = vmatpush2.bf16.msra.mxu0 0
    %1435 = vmatprep.subr.bf16.mxu0 0
    %1436 = vmatpush2.bf16.msra.mxu0 0
    %1437 = vmatprep.subr.bf16.mxu0 0
    %1438 = vmatpush2.bf16.msra.mxu0 0
    %1439 = vmatprep.subr.bf16.mxu0 0
    %1440 = vmatpush2.bf16.msra.mxu0 0
    %1441 = vmatprep.subr.bf16.mxu0 0
    %1442 = vmatpush2.bf16.msra.mxu0 0
    %1443 = vmatprep.subr.bf16.mxu0 0
    %1444 = vmatpush2.bf16.msra.mxu0 0
    %1445 = vmatprep.subr.bf16.mxu0 0
    %1446 = vmatpush2.bf16.msra.mxu0 0
    %1447 = vmatprep.subr.bf16.mxu0 0
    %1448 = vmatpush2.bf16.msra.mxu0 0
    %1449 = vmatprep.mubr.bf16.mxu0 0
    %1450 = vmatmul.mubr.bf16.gmra.mxu0 %v1412
    %v1451 = vpop.f32.mrf.mxu0
    %v1452 = vadd.f32 0.0, %v1451
    %v1453 = vpop.f32.mrf.mxu0
    %v1454 = vpop.f32.mrf.mxu0
    %v1455 = vadd.f32 0.0, %v1454
    %v1456 = vpop.f32.mrf.mxu0
    %1457 = vmatprep.mubr.bf16.mxu0 0
    %1458 = vmatmul.mubr.bf16.gmra.mxu0 %v1415
    %v1459 = vpop.f32.mrf.mxu0
    %v1460 = vadd.f32 0.0, %v1459
    %v1461 = vpop.f32.mrf.mxu0
    %v1462 = vpop.f32.mrf.mxu0
    %v1463 = vadd.f32 0.0, %v1462
    %v1464 = vpop.f32.mrf.mxu0
    %1465 = vdwg.mxu0
    %v1466 = vpack.c.bf16 %v1455, %v1452
    %v1467 = vpack.c.bf16 %v1463, %v1460
    %s1468 = scalar_lea.vmem [#allocation8], 48
    %v1469 = vld [vmem:[%s1468] sm:$0xf]
    %v1470 = vld [vmem:[%s1468 + $0x4] sm:$0xf]
    %v1471 = vld [vmem:[%s1468 + $0x8] sm:$0xf]
    %v1472 = vld [vmem:[%s1468 + $0xc] sm:$0xf]
    %v1477 = vunpack.c.l.b16 %v1469
    %v1478 = vunpack.c.l.b16 %v1470
    %v1479 = vunpack.c.l.b16 %v1471
    %v1480 = vunpack.c.l.b16 %v1472
    %v1481 = vpack.c.b16 %v1478, %v1477
    %v1482 = vpack.c.b16 %v1480, %v1479
    %v1486 = vsel %vm121, %v1466, 0
    %v1489 = vsel %vm121, %v1467, 0
    %1491 = vmatprep.subr.bf16.mxu0 0
    %1492 = vmatpush1.bf16.msra.mxu0 0
    %1493 = vmatprep.subr.bf16.mxu0 0
    %1494 = vmatpush1.bf16.msra.mxu0 0
    %1495 = vmatprep.subr.bf16.mxu0 0
    %1496 = vmatpush1.bf16.msra.mxu0 0
    %1497 = vmatprep.subr.bf16.mxu0 0
    %1498 = vmatpush1.bf16.msra.mxu0 0
    %1499 = vmatprep.subr.bf16.mxu0 0
    %1500 = vmatpush1.bf16.msra.mxu0 0
    %1501 = vmatprep.subr.bf16.mxu0 0
    %1502 = vmatpush1.bf16.msra.mxu0 0
    %1503 = vmatprep.subr.bf16.mxu0 0
    %1504 = vmatpush1.bf16.msra.mxu0 %v1482
    %1505 = vmatprep.subr.bf16.mxu0 0
    %1506 = vmatpush1.bf16.msra.mxu0 %v1481
    %1507 = vmatprep.subr.bf16.mxu0 0
    %1508 = vmatpush2.bf16.msra.mxu0 0
    %1509 = vmatprep.subr.bf16.mxu0 0
    %1510 = vmatpush2.bf16.msra.mxu0 0
    %1511 = vmatprep.subr.bf16.mxu0 0
    %1512 = vmatpush2.bf16.msra.mxu0 0
    %1513 = vmatprep.subr.bf16.mxu0 0
    %1514 = vmatpush2.bf16.msra.mxu0 0
    %1515 = vmatprep.subr.bf16.mxu0 0
    %1516 = vmatpush2.bf16.msra.mxu0 0
    %1517 = vmatprep.subr.bf16.mxu0 0
    %1518 = vmatpush2.bf16.msra.mxu0 0
    %1519 = vmatprep.subr.bf16.mxu0 0
    %1520 = vmatpush2.bf16.msra.mxu0 0
    %1521 = vmatprep.subr.bf16.mxu0 0
    %1522 = vmatpush2.bf16.msra.mxu0 0
    %1523 = vmatprep.mubr.bf16.mxu0 0
    %1524 = vmatmul.mubr.bf16.gmra.mxu0 %v1486
    %v1525 = vpop.f32.mrf.mxu0
    %v1526 = vadd.f32 0.0, %v1525
    %v1527 = vpop.f32.mrf.mxu0
    %v1528 = vpop.f32.mrf.mxu0
    %v1529 = vadd.f32 0.0, %v1528
    %v1530 = vpop.f32.mrf.mxu0
    %1531 = vmatprep.mubr.bf16.mxu0 0
    %1532 = vmatmul.mubr.bf16.gmra.mxu0 %v1489
    %v1533 = vpop.f32.mrf.mxu0
    %v1534 = vadd.f32 0.0, %v1533
    %v1535 = vpop.f32.mrf.mxu0
    %v1536 = vpop.f32.mrf.mxu0
    %v1537 = vadd.f32 0.0, %v1536
    %v1538 = vpop.f32.mrf.mxu0
    %1539 = vdwg.mxu0
    %v1540 = vadd.f32 %v1392, %v1526
    %v1541 = vadd.f32 %v1393, %v1529
    %v1542 = vadd.f32 %v1394, %v1534
    %v1543 = vadd.f32 %v1395, %v1537
    %s1544 = scalar_lea.vmem [#allocation7], 64
    %v1545 = vld [vmem:[%s1544] sm:$0xf]
    %v1546 = vld [vmem:[%s1544 + $0x4] sm:$0xf]
    %v1547 = vld [vmem:[%s1544 + $0x8] sm:$0xf]
    %v1548 = vld [vmem:[%s1544 + $0xc] sm:$0xf]
    %v1553 = vunpack.c.l.b16 %v1545
    %v1554 = vunpack.c.l.b16 %v1546
    %v1555 = vunpack.c.l.b16 %v1547
    %v1556 = vunpack.c.l.b16 %v1548
    %v1557 = vpack.c.b16 %v1554, %v1553
    %v1558 = vpack.c.b16 %v1556, %v1555
    %v1560 = vsel %vm121, %v1557, 0
    %v1563 = vsel %vm121, %v1558, 0
    %1565 = vmatprep.subr.bf16.mxu0 0
    %1566 = vmatpush1.bf16.msra.mxu0 0
    %1567 = vmatprep.subr.bf16.mxu0 0
    %1568 = vmatpush1.bf16.msra.mxu0 0
    %1569 = vmatprep.subr.bf16.mxu0 0
    %1570 = vmatpush1.bf16.msra.mxu0 0
    %1571 = vmatprep.subr.bf16.mxu0 0
    %1572 = vmatpush1.bf16.msra.mxu0 0
    %1573 = vmatprep.subr.bf16.mxu0 0
    %1574 = vmatpush1.bf16.msra.mxu0 0
    %1575 = vmatprep.subr.bf16.mxu0 0
    %1576 = vmatpush1.bf16.msra.mxu0 0
    %1577 = vmatprep.subr.bf16.mxu0 0
    %1578 = vmatpush1.bf16.msra.mxu0 %v961
    %1579 = vmatprep.subr.bf16.mxu0 0
    %1580 = vmatpush1.bf16.msra.mxu0 %v960
    %1581 = vmatprep.subr.bf16.mxu0 0
    %1582 = vmatpush2.bf16.msra.mxu0 0
    %1583 = vmatprep.subr.bf16.mxu0 0
    %1584 = vmatpush2.bf16.msra.mxu0 0
    %1585 = vmatprep.subr.bf16.mxu0 0
    %1586 = vmatpush2.bf16.msra.mxu0 0
    %1587 = vmatprep.subr.bf16.mxu0 0
    %1588 = vmatpush2.bf16.msra.mxu0 0
    %1589 = vmatprep.subr.bf16.mxu0 0
    %1590 = vmatpush2.bf16.msra.mxu0 0
    %1591 = vmatprep.subr.bf16.mxu0 0
    %1592 = vmatpush2.bf16.msra.mxu0 0
    %1593 = vmatprep.subr.bf16.mxu0 0
    %1594 = vmatpush2.bf16.msra.mxu0 0
    %1595 = vmatprep.subr.bf16.mxu0 0
    %1596 = vmatpush2.bf16.msra.mxu0 0
    %1597 = vmatprep.mubr.bf16.mxu0 0
    %1598 = vmatmul.mubr.bf16.gmra.mxu0 %v1560
    %v1599 = vpop.f32.mrf.mxu0
    %v1600 = vadd.f32 0.0, %v1599
    %v1601 = vpop.f32.mrf.mxu0
    %v1602 = vpop.f32.mrf.mxu0
    %v1603 = vadd.f32 0.0, %v1602
    %v1604 = vpop.f32.mrf.mxu0
    %1605 = vmatprep.mubr.bf16.mxu0 0
    %1606 = vmatmul.mubr.bf16.gmra.mxu0 %v1563
    %v1607 = vpop.f32.mrf.mxu0
    %v1608 = vadd.f32 0.0, %v1607
    %v1609 = vpop.f32.mrf.mxu0
    %v1610 = vpop.f32.mrf.mxu0
    %v1611 = vadd.f32 0.0, %v1610
    %v1612 = vpop.f32.mrf.mxu0
    %1613 = vdwg.mxu0
    %v1614 = vpack.c.bf16 %v1603, %v1600
    %v1615 = vpack.c.bf16 %v1611, %v1608
    %s1616 = scalar_lea.vmem [#allocation8], 64
    %v1617 = vld [vmem:[%s1616] sm:$0xf]
    %v1618 = vld [vmem:[%s1616 + $0x4] sm:$0xf]
    %v1619 = vld [vmem:[%s1616 + $0x8] sm:$0xf]
    %v1620 = vld [vmem:[%s1616 + $0xc] sm:$0xf]
    %v1625 = vunpack.c.l.b16 %v1617
    %v1626 = vunpack.c.l.b16 %v1618
    %v1627 = vunpack.c.l.b16 %v1619
    %v1628 = vunpack.c.l.b16 %v1620
    %v1629 = vpack.c.b16 %v1626, %v1625
    %v1630 = vpack.c.b16 %v1628, %v1627
    %v1634 = vsel %vm121, %v1614, 0
    %v1637 = vsel %vm121, %v1615, 0
    %1639 = vmatprep.subr.bf16.mxu0 0
    %1640 = vmatpush1.bf16.msra.mxu0 0
    %1641 = vmatprep.subr.bf16.mxu0 0
    %1642 = vmatpush1.bf16.msra.mxu0 0
    %1643 = vmatprep.subr.bf16.mxu0 0
    %1644 = vmatpush1.bf16.msra.mxu0 0
    %1645 = vmatprep.subr.bf16.mxu0 0
    %1646 = vmatpush1.bf16.msra.mxu0 0
    %1647 = vmatprep.subr.bf16.mxu0 0
    %1648 = vmatpush1.bf16.msra.mxu0 0
    %1649 = vmatprep.subr.bf16.mxu0 0
    %1650 = vmatpush1.bf16.msra.mxu0 0
    %1651 = vmatprep.subr.bf16.mxu0 0
    %1652 = vmatpush1.bf16.msra.mxu0 %v1630
    %1653 = vmatprep.subr.bf16.mxu0 0
    %1654 = vmatpush1.bf16.msra.mxu0 %v1629
    %1655 = vmatprep.subr.bf16.mxu0 0
    %1656 = vmatpush2.bf16.msra.mxu0 0
    %1657 = vmatprep.subr.bf16.mxu0 0
    %1658 = vmatpush2.bf16.msra.mxu0 0
    %1659 = vmatprep.subr.bf16.mxu0 0
    %1660 = vmatpush2.bf16.msra.mxu0 0
    %1661 = vmatprep.subr.bf16.mxu0 0
    %1662 = vmatpush2.bf16.msra.mxu0 0
    %1663 = vmatprep.subr.bf16.mxu0 0
    %1664 = vmatpush2.bf16.msra.mxu0 0
    %1665 = vmatprep.subr.bf16.mxu0 0
    %1666 = vmatpush2.bf16.msra.mxu0 0
    %1667 = vmatprep.subr.bf16.mxu0 0
    %1668 = vmatpush2.bf16.msra.mxu0 0
    %1669 = vmatprep.subr.bf16.mxu0 0
    %1670 = vmatpush2.bf16.msra.mxu0 0
    %1671 = vmatprep.mubr.bf16.mxu0 0
    %1672 = vmatmul.mubr.bf16.gmra.mxu0 %v1634
    %v1673 = vpop.f32.mrf.mxu0
    %v1674 = vadd.f32 0.0, %v1673
    %v1675 = vpop.f32.mrf.mxu0
    %v1676 = vpop.f32.mrf.mxu0
    %v1677 = vadd.f32 0.0, %v1676
    %v1678 = vpop.f32.mrf.mxu0
    %1679 = vmatprep.mubr.bf16.mxu0 0
    %1680 = vmatmul.mubr.bf16.gmra.mxu0 %v1637
    %v1681 = vpop.f32.mrf.mxu0
    %v1682 = vadd.f32 0.0, %v1681
    %v1683 = vpop.f32.mrf.mxu0
    %v1684 = vpop.f32.mrf.mxu0
    %v1685 = vadd.f32 0.0, %v1684
    %v1686 = vpop.f32.mrf.mxu0
    %1687 = vdwg.mxu0
    %v1688 = vadd.f32 %v1540, %v1674
    %v1689 = vadd.f32 %v1541, %v1677
    %v1690 = vadd.f32 %v1542, %v1682
    %v1691 = vadd.f32 %v1543, %v1685
    %s1692 = scalar_lea.vmem [#allocation7], 80
    %v1693 = vld [vmem:[%s1692] sm:$0xf]
    %v1694 = vld [vmem:[%s1692 + $0x4] sm:$0xf]
    %v1695 = vld [vmem:[%s1692 + $0x8] sm:$0xf]
    %v1696 = vld [vmem:[%s1692 + $0xc] sm:$0xf]
    %v1701 = vunpack.c.l.b16 %v1693
    %v1702 = vunpack.c.l.b16 %v1694
    %v1703 = vunpack.c.l.b16 %v1695
    %v1704 = vunpack.c.l.b16 %v1696
    %v1705 = vpack.c.b16 %v1702, %v1701
    %v1706 = vpack.c.b16 %v1704, %v1703
    %v1708 = vsel %vm121, %v1705, 0
    %v1711 = vsel %vm121, %v1706, 0
    %1713 = vmatprep.subr.bf16.mxu0 0
    %1714 = vmatpush1.bf16.msra.mxu0 0
    %1715 = vmatprep.subr.bf16.mxu0 0
    %1716 = vmatpush1.bf16.msra.mxu0 0
    %1717 = vmatprep.subr.bf16.mxu0 0
    %1718 = vmatpush1.bf16.msra.mxu0 0
    %1719 = vmatprep.subr.bf16.mxu0 0
    %1720 = vmatpush1.bf16.msra.mxu0 0
    %1721 = vmatprep.subr.bf16.mxu0 0
    %1722 = vmatpush1.bf16.msra.mxu0 0
    %1723 = vmatprep.subr.bf16.mxu0 0
    %1724 = vmatpush1.bf16.msra.mxu0 0
    %1725 = vmatprep.subr.bf16.mxu0 0
    %1726 = vmatpush1.bf16.msra.mxu0 %v961
    %1727 = vmatprep.subr.bf16.mxu0 0
    %1728 = vmatpush1.bf16.msra.mxu0 %v960
    %1729 = vmatprep.subr.bf16.mxu0 0
    %1730 = vmatpush2.bf16.msra.mxu0 0
    %1731 = vmatprep.subr.bf16.mxu0 0
    %1732 = vmatpush2.bf16.msra.mxu0 0
    %1733 = vmatprep.subr.bf16.mxu0 0
    %1734 = vmatpush2.bf16.msra.mxu0 0
    %1735 = vmatprep.subr.bf16.mxu0 0
    %1736 = vmatpush2.bf16.msra.mxu0 0
    %1737 = vmatprep.subr.bf16.mxu0 0
    %1738 = vmatpush2.bf16.msra.mxu0 0
    %1739 = vmatprep.subr.bf16.mxu0 0
    %1740 = vmatpush2.bf16.msra.mxu0 0
    %1741 = vmatprep.subr.bf16.mxu0 0
    %1742 = vmatpush2.bf16.msra.mxu0 0
    %1743 = vmatprep.subr.bf16.mxu0 0
    %1744 = vmatpush2.bf16.msra.mxu0 0
    %1745 = vmatprep.mubr.bf16.mxu0 0
    %1746 = vmatmul.mubr.bf16.gmra.mxu0 %v1708
    %v1747 = vpop.f32.mrf.mxu0
    %v1748 = vadd.f32 0.0, %v1747
    %v1749 = vpop.f32.mrf.mxu0
    %v1750 = vpop.f32.mrf.mxu0
    %v1751 = vadd.f32 0.0, %v1750
    %v1752 = vpop.f32.mrf.mxu0
    %1753 = vmatprep.mubr.bf16.mxu0 0
    %1754 = vmatmul.mubr.bf16.gmra.mxu0 %v1711
    %v1755 = vpop.f32.mrf.mxu0
    %v1756 = vadd.f32 0.0, %v1755
    %v1757 = vpop.f32.mrf.mxu0
    %v1758 = vpop.f32.mrf.mxu0
    %v1759 = vadd.f32 0.0, %v1758
    %v1760 = vpop.f32.mrf.mxu0
    %1761 = vdwg.mxu0
    %v1762 = vpack.c.bf16 %v1751, %v1748
    %v1763 = vpack.c.bf16 %v1759, %v1756
    %s1764 = scalar_lea.vmem [#allocation8], 80
    %v1765 = vld [vmem:[%s1764] sm:$0xf]
    %v1766 = vld [vmem:[%s1764 + $0x4] sm:$0xf]
    %v1767 = vld [vmem:[%s1764 + $0x8] sm:$0xf]
    %v1768 = vld [vmem:[%s1764 + $0xc] sm:$0xf]
    %v1773 = vunpack.c.l.b16 %v1765
    %v1774 = vunpack.c.l.b16 %v1766
    %v1775 = vunpack.c.l.b16 %v1767
    %v1776 = vunpack.c.l.b16 %v1768
    %v1777 = vpack.c.b16 %v1774, %v1773
    %v1778 = vpack.c.b16 %v1776, %v1775
    %v1782 = vsel %vm121, %v1762, 0
    %v1785 = vsel %vm121, %v1763, 0
    %1787 = vmatprep.subr.bf16.mxu0 0
    %1788 = vmatpush1.bf16.msra.mxu0 0
    %1789 = vmatprep.subr.bf16.mxu0 0
    %1790 = vmatpush1.bf16.msra.mxu0 0
    %1791 = vmatprep.subr.bf16.mxu0 0
    %1792 = vmatpush1.bf16.msra.mxu0 0
    %1793 = vmatprep.subr.bf16.mxu0 0
    %1794 = vmatpush1.bf16.msra.mxu0 0
    %1795 = vmatprep.subr.bf16.mxu0 0
    %1796 = vmatpush1.bf16.msra.mxu0 0
    %1797 = vmatprep.subr.bf16.mxu0 0
    %1798 = vmatpush1.bf16.msra.mxu0 0
    %1799 = vmatprep.subr.bf16.mxu0 0
    %1800 = vmatpush1.bf16.msra.mxu0 %v1778
    %1801 = vmatprep.subr.bf16.mxu0 0
    %1802 = vmatpush1.bf16.msra.mxu0 %v1777
    %1803 = vmatprep.subr.bf16.mxu0 0
    %1804 = vmatpush2.bf16.msra.mxu0 0
    %1805 = vmatprep.subr.bf16.mxu0 0
    %1806 = vmatpush2.bf16.msra.mxu0 0
    %1807 = vmatprep.subr.bf16.mxu0 0
    %1808 = vmatpush2.bf16.msra.mxu0 0
    %1809 = vmatprep.subr.bf16.mxu0 0
    %1810 = vmatpush2.bf16.msra.mxu0 0
    %1811 = vmatprep.subr.bf16.mxu0 0
    %1812 = vmatpush2.bf16.msra.mxu0 0
    %1813 = vmatprep.subr.bf16.mxu0 0
    %1814 = vmatpush2.bf16.msra.mxu0 0
    %1815 = vmatprep.subr.bf16.mxu0 0
    %1816 = vmatpush2.bf16.msra.mxu0 0
    %1817 = vmatprep.subr.bf16.mxu0 0
    %1818 = vmatpush2.bf16.msra.mxu0 0
    %1819 = vmatprep.mubr.bf16.mxu0 0
    %1820 = vmatmul.mubr.bf16.gmra.mxu0 %v1782
    %v1821 = vpop.f32.mrf.mxu0
    %v1822 = vadd.f32 0.0, %v1821
    %v1823 = vpop.f32.mrf.mxu0
    %v1824 = vpop.f32.mrf.mxu0
    %v1825 = vadd.f32 0.0, %v1824
    %v1826 = vpop.f32.mrf.mxu0
    %1827 = vmatprep.mubr.bf16.mxu0 0
    %1828 = vmatmul.mubr.bf16.gmra.mxu0 %v1785
    %v1829 = vpop.f32.mrf.mxu0
    %v1830 = vadd.f32 0.0, %v1829
    %v1831 = vpop.f32.mrf.mxu0
    %v1832 = vpop.f32.mrf.mxu0
    %v1833 = vadd.f32 0.0, %v1832
    %v1834 = vpop.f32.mrf.mxu0
    %1835 = vdwg.mxu0
    %v1836 = vadd.f32 %v1688, %v1822
    %v1837 = vadd.f32 %v1689, %v1825
    %v1838 = vadd.f32 %v1690, %v1830
    %v1839 = vadd.f32 %v1691, %v1833
    %s1840 = scalar_lea.vmem [#allocation7], 96
    %v1841 = vld [vmem:[%s1840] sm:$0xf]
    %v1842 = vld [vmem:[%s1840 + $0x4] sm:$0xf]
    %v1843 = vld [vmem:[%s1840 + $0x8] sm:$0xf]
    %v1844 = vld [vmem:[%s1840 + $0xc] sm:$0xf]
    %v1849 = vunpack.c.l.b16 %v1841
    %v1850 = vunpack.c.l.b16 %v1842
    %v1851 = vunpack.c.l.b16 %v1843
    %v1852 = vunpack.c.l.b16 %v1844
    %v1853 = vpack.c.b16 %v1850, %v1849
    %v1854 = vpack.c.b16 %v1852, %v1851
    %v1856 = vsel %vm121, %v1853, 0
    %v1859 = vsel %vm121, %v1854, 0
    %1861 = vmatprep.subr.bf16.mxu0 0
    %1862 = vmatpush1.bf16.msra.mxu0 0
    %1863 = vmatprep.subr.bf16.mxu0 0
    %1864 = vmatpush1.bf16.msra.mxu0 0
    %1865 = vmatprep.subr.bf16.mxu0 0
    %1866 = vmatpush1.bf16.msra.mxu0 0
    %1867 = vmatprep.subr.bf16.mxu0 0
    %1868 = vmatpush1.bf16.msra.mxu0 0
    %1869 = vmatprep.subr.bf16.mxu0 0
    %1870 = vmatpush1.bf16.msra.mxu0 0
    %1871 = vmatprep.subr.bf16.mxu0 0
    %1872 = vmatpush1.bf16.msra.mxu0 0
    %1873 = vmatprep.subr.bf16.mxu0 0
    %1874 = vmatpush1.bf16.msra.mxu0 %v961
    %1875 = vmatprep.subr.bf16.mxu0 0
    %1876 = vmatpush1.bf16.msra.mxu0 %v960
    %1877 = vmatprep.subr.bf16.mxu0 0
    %1878 = vmatpush2.bf16.msra.mxu0 0
    %1879 = vmatprep.subr.bf16.mxu0 0
    %1880 = vmatpush2.bf16.msra.mxu0 0
    %1881 = vmatprep.subr.bf16.mxu0 0
    %1882 = vmatpush2.bf16.msra.mxu0 0
    %1883 = vmatprep.subr.bf16.mxu0 0
    %1884 = vmatpush2.bf16.msra.mxu0 0
    %1885 = vmatprep.subr.bf16.mxu0 0
    %1886 = vmatpush2.bf16.msra.mxu0 0
    %1887 = vmatprep.subr.bf16.mxu0 0
    %1888 = vmatpush2.bf16.msra.mxu0 0
    %1889 = vmatprep.subr.bf16.mxu0 0
    %1890 = vmatpush2.bf16.msra.mxu0 0
    %1891 = vmatprep.subr.bf16.mxu0 0
    %1892 = vmatpush2.bf16.msra.mxu0 0
    %1893 = vmatprep.mubr.bf16.mxu0 0
    %1894 = vmatmul.mubr.bf16.gmra.mxu0 %v1856
    %v1895 = vpop.f32.mrf.mxu0
    %v1896 = vadd.f32 0.0, %v1895
    %v1897 = vpop.f32.mrf.mxu0
    %v1898 = vpop.f32.mrf.mxu0
    %v1899 = vadd.f32 0.0, %v1898
    %v1900 = vpop.f32.mrf.mxu0
    %1901 = vmatprep.mubr.bf16.mxu0 0
    %1902 = vmatmul.mubr.bf16.gmra.mxu0 %v1859
    %v1903 = vpop.f32.mrf.mxu0
    %v1904 = vadd.f32 0.0, %v1903
    %v1905 = vpop.f32.mrf.mxu0
    %v1906 = vpop.f32.mrf.mxu0
    %v1907 = vadd.f32 0.0, %v1906
    %v1908 = vpop.f32.mrf.mxu0
    %1909 = vdwg.mxu0
    %v1910 = vpack.c.bf16 %v1899, %v1896
    %v1911 = vpack.c.bf16 %v1907, %v1904
    %s1912 = scalar_lea.vmem [#allocation8], 96
    %v1913 = vld [vmem:[%s1912] sm:$0xf]
    %v1914 = vld [vmem:[%s1912 + $0x4] sm:$0xf]
    %v1915 = vld [vmem:[%s1912 + $0x8] sm:$0xf]
    %v1916 = vld [vmem:[%s1912 + $0xc] sm:$0xf]
    %v1921 = vunpack.c.l.b16 %v1913
    %v1922 = vunpack.c.l.b16 %v1914
    %v1923 = vunpack.c.l.b16 %v1915
    %v1924 = vunpack.c.l.b16 %v1916
    %v1925 = vpack.c.b16 %v1922, %v1921
    %v1926 = vpack.c.b16 %v1924, %v1923
    %v1930 = vsel %vm121, %v1910, 0
    %v1933 = vsel %vm121, %v1911, 0
    %1935 = vmatprep.subr.bf16.mxu0 0
    %1936 = vmatpush1.bf16.msra.mxu0 0
    %1937 = vmatprep.subr.bf16.mxu0 0
    %1938 = vmatpush1.bf16.msra.mxu0 0
    %1939 = vmatprep.subr.bf16.mxu0 0
    %1940 = vmatpush1.bf16.msra.mxu0 0
    %1941 = vmatprep.subr.bf16.mxu0 0
    %1942 = vmatpush1.bf16.msra.mxu0 0
    %1943 = vmatprep.subr.bf16.mxu0 0
    %1944 = vmatpush1.bf16.msra.mxu0 0
    %1945 = vmatprep.subr.bf16.mxu0 0
    %1946 = vmatpush1.bf16.msra.mxu0 0
    %1947 = vmatprep.subr.bf16.mxu0 0
    %1948 = vmatpush1.bf16.msra.mxu0 %v1926
    %1949 = vmatprep.subr.bf16.mxu0 0
    %1950 = vmatpush1.bf16.msra.mxu0 %v1925
    %1951 = vmatprep.subr.bf16.mxu0 0
    %1952 = vmatpush2.bf16.msra.mxu0 0
    %1953 = vmatprep.subr.bf16.mxu0 0
    %1954 = vmatpush2.bf16.msra.mxu0 0
    %1955 = vmatprep.subr.bf16.mxu0 0
    %1956 = vmatpush2.bf16.msra.mxu0 0
    %1957 = vmatprep.subr.bf16.mxu0 0
    %1958 = vmatpush2.bf16.msra.mxu0 0
    %1959 = vmatprep.subr.bf16.mxu0 0
    %1960 = vmatpush2.bf16.msra.mxu0 0
    %1961 = vmatprep.subr.bf16.mxu0 0
    %1962 = vmatpush2.bf16.msra.mxu0 0
    %1963 = vmatprep.subr.bf16.mxu0 0
    %1964 = vmatpush2.bf16.msra.mxu0 0
    %1965 = vmatprep.subr.bf16.mxu0 0
    %1966 = vmatpush2.bf16.msra.mxu0 0
    %1967 = vmatprep.mubr.bf16.mxu0 0
    %1968 = vmatmul.mubr.bf16.gmra.mxu0 %v1930
    %v1969 = vpop.f32.mrf.mxu0
    %v1970 = vadd.f32 0.0, %v1969
    %v1971 = vpop.f32.mrf.mxu0
    %v1972 = vpop.f32.mrf.mxu0
    %v1973 = vadd.f32 0.0, %v1972
    %v1974 = vpop.f32.mrf.mxu0
    %1975 = vmatprep.mubr.bf16.mxu0 0
    %1976 = vmatmul.mubr.bf16.gmra.mxu0 %v1933
    %v1977 = vpop.f32.mrf.mxu0
    %v1978 = vadd.f32 0.0, %v1977
    %v1979 = vpop.f32.mrf.mxu0
    %v1980 = vpop.f32.mrf.mxu0
    %v1981 = vadd.f32 0.0, %v1980
    %v1982 = vpop.f32.mrf.mxu0
    %1983 = vdwg.mxu0
    %v1984 = vadd.f32 %v1836, %v1970
    %v1985 = vadd.f32 %v1837, %v1973
    %v1986 = vadd.f32 %v1838, %v1978
    %v1987 = vadd.f32 %v1839, %v1981
    %s1988 = scalar_lea.vmem [#allocation7], 112
    %v1989 = vld [vmem:[%s1988] sm:$0xf]
    %v1990 = vld [vmem:[%s1988 + $0x4] sm:$0xf]
    %v1991 = vld [vmem:[%s1988 + $0x8] sm:$0xf]
    %v1992 = vld [vmem:[%s1988 + $0xc] sm:$0xf]
    %v1997 = vunpack.c.l.b16 %v1989
    %v1998 = vunpack.c.l.b16 %v1990
    %v1999 = vunpack.c.l.b16 %v1991
    %v2000 = vunpack.c.l.b16 %v1992
    %v2001 = vpack.c.b16 %v1998, %v1997
    %v2002 = vpack.c.b16 %v2000, %v1999
    %v2004 = vsel %vm121, %v2001, 0
    %v2007 = vsel %vm121, %v2002, 0
    %2009 = vmatprep.subr.bf16.mxu0 0
    %2010 = vmatpush1.bf16.msra.mxu0 0
    %2011 = vmatprep.subr.bf16.mxu0 0
    %2012 = vmatpush1.bf16.msra.mxu0 0
    %2013 = vmatprep.subr.bf16.mxu0 0
    %2014 = vmatpush1.bf16.msra.mxu0 0
    %2015 = vmatprep.subr.bf16.mxu0 0
    %2016 = vmatpush1.bf16.msra.mxu0 0
    %2017 = vmatprep.subr.bf16.mxu0 0
    %2018 = vmatpush1.bf16.msra.mxu0 0
    %2019 = vmatprep.subr.bf16.mxu0 0
    %2020 = vmatpush1.bf16.msra.mxu0 0
    %2021 = vmatprep.subr.bf16.mxu0 0
    %2022 = vmatpush1.bf16.msra.mxu0 %v961
    %2023 = vmatprep.subr.bf16.mxu0 0
    %2024 = vmatpush1.bf16.msra.mxu0 %v960
    %2025 = vmatprep.subr.bf16.mxu0 0
    %2026 = vmatpush2.bf16.msra.mxu0 0
    %2027 = vmatprep.subr.bf16.mxu0 0
    %2028 = vmatpush2.bf16.msra.mxu0 0
    %2029 = vmatprep.subr.bf16.mxu0 0
    %2030 = vmatpush2.bf16.msra.mxu0 0
    %2031 = vmatprep.subr.bf16.mxu0 0
    %2032 = vmatpush2.bf16.msra.mxu0 0
    %2033 = vmatprep.subr.bf16.mxu0 0
    %2034 = vmatpush2.bf16.msra.mxu0 0
    %2035 = vmatprep.subr.bf16.mxu0 0
    %2036 = vmatpush2.bf16.msra.mxu0 0
    %2037 = vmatprep.subr.bf16.mxu0 0
    %2038 = vmatpush2.bf16.msra.mxu0 0
    %2039 = vmatprep.subr.bf16.mxu0 0
    %2040 = vmatpush2.bf16.msra.mxu0 0
    %2041 = vmatprep.mubr.bf16.mxu0 0
    %2042 = vmatmul.mubr.bf16.gmra.mxu0 %v2004
    %v2043 = vpop.f32.mrf.mxu0
    %v2044 = vadd.f32 0.0, %v2043
    %v2045 = vpop.f32.mrf.mxu0
    %v2046 = vpop.f32.mrf.mxu0
    %v2047 = vadd.f32 0.0, %v2046
    %v2048 = vpop.f32.mrf.mxu0
    %2049 = vmatprep.mubr.bf16.mxu0 0
    %2050 = vmatmul.mubr.bf16.gmra.mxu0 %v2007
    %v2051 = vpop.f32.mrf.mxu0
    %v2052 = vadd.f32 0.0, %v2051
    %v2053 = vpop.f32.mrf.mxu0
    %v2054 = vpop.f32.mrf.mxu0
    %v2055 = vadd.f32 0.0, %v2054
    %v2056 = vpop.f32.mrf.mxu0
    %2057 = vdwg.mxu0
    %v2058 = vpack.c.bf16 %v2047, %v2044
    %v2059 = vpack.c.bf16 %v2055, %v2052
    %s2060 = scalar_lea.vmem [#allocation8], 112
    %v2061 = vld [vmem:[%s2060] sm:$0xf]
    %v2062 = vld [vmem:[%s2060 + $0x4] sm:$0xf]
    %v2063 = vld [vmem:[%s2060 + $0x8] sm:$0xf]
    %v2064 = vld [vmem:[%s2060 + $0xc] sm:$0xf]
    %v2069 = vunpack.c.l.b16 %v2061
    %v2070 = vunpack.c.l.b16 %v2062
    %v2071 = vunpack.c.l.b16 %v2063
    %v2072 = vunpack.c.l.b16 %v2064
    %v2073 = vpack.c.b16 %v2070, %v2069
    %v2074 = vpack.c.b16 %v2072, %v2071
    %v2078 = vsel %vm121, %v2058, 0
    %v2081 = vsel %vm121, %v2059, 0
    %2083 = vmatprep.subr.bf16.mxu0 0
    %2084 = vmatpush1.bf16.msra.mxu0 0
    %2085 = vmatprep.subr.bf16.mxu0 0
    %2086 = vmatpush1.bf16.msra.mxu0 0
    %2087 = vmatprep.subr.bf16.mxu0 0
    %2088 = vmatpush1.bf16.msra.mxu0 0
    %2089 = vmatprep.subr.bf16.mxu0 0
    %2090 = vmatpush1.bf16.msra.mxu0 0
    %2091 = vmatprep.subr.bf16.mxu0 0
    %2092 = vmatpush1.bf16.msra.mxu0 0
    %2093 = vmatprep.subr.bf16.mxu0 0
    %2094 = vmatpush1.bf16.msra.mxu0 0
    %2095 = vmatprep.subr.bf16.mxu0 0
    %2096 = vmatpush1.bf16.msra.mxu0 %v2074
    %2097 = vmatprep.subr.bf16.mxu0 0
    %2098 = vmatpush1.bf16.msra.mxu0 %v2073
    %2099 = vmatprep.subr.bf16.mxu0 0
    %2100 = vmatpush2.bf16.msra.mxu0 0
    %2101 = vmatprep.subr.bf16.mxu0 0
    %2102 = vmatpush2.bf16.msra.mxu0 0
    %2103 = vmatprep.subr.bf16.mxu0 0
    %2104 = vmatpush2.bf16.msra.mxu0 0
    %2105 = vmatprep.subr.bf16.mxu0 0
    %2106 = vmatpush2.bf16.msra.mxu0 0
    %2107 = vmatprep.subr.bf16.mxu0 0
    %2108 = vmatpush2.bf16.msra.mxu0 0
    %2109 = vmatprep.subr.bf16.mxu0 0
    %2110 = vmatpush2.bf16.msra.mxu0 0
    %2111 = vmatprep.subr.bf16.mxu0 0
    %2112 = vmatpush2.bf16.msra.mxu0 0
    %2113 = vmatprep.subr.bf16.mxu0 0
    %2114 = vmatpush2.bf16.msra.mxu0 0
    %2115 = vmatprep.mubr.bf16.mxu0 0
    %2116 = vmatmul.mubr.bf16.gmra.mxu0 %v2078
    %v2117 = vpop.f32.mrf.mxu0
    %v2118 = vadd.f32 0.0, %v2117
    %v2119 = vpop.f32.mrf.mxu0
    %v2120 = vpop.f32.mrf.mxu0
    %v2121 = vadd.f32 0.0, %v2120
    %v2122 = vpop.f32.mrf.mxu0
    %2123 = vmatprep.mubr.bf16.mxu0 0
    %2124 = vmatmul.mubr.bf16.gmra.mxu0 %v2081
    %v2125 = vpop.f32.mrf.mxu0
    %v2126 = vadd.f32 0.0, %v2125
    %v2127 = vpop.f32.mrf.mxu0
    %v2128 = vpop.f32.mrf.mxu0
    %v2129 = vadd.f32 0.0, %v2128
    %v2130 = vpop.f32.mrf.mxu0
    %2131 = vdwg.mxu0
    %v2132 = vadd.f32 %v1984, %v2118
    %v2133 = vadd.f32 %v1985, %v2121
    %v2134 = vadd.f32 %v1986, %v2126
    %v2135 = vadd.f32 %v1987, %v2129
    %s2136 = scalar_lea.vmem [#allocation7], 128
    %v2137 = vld [vmem:[%s2136] sm:$0xf]
    %v2138 = vld [vmem:[%s2136 + $0x4] sm:$0xf]
    %v2139 = vld [vmem:[%s2136 + $0x8] sm:$0xf]
    %v2140 = vld [vmem:[%s2136 + $0xc] sm:$0xf]
    %v2145 = vunpack.c.l.b16 %v2137
    %v2146 = vunpack.c.l.b16 %v2138
    %v2147 = vunpack.c.l.b16 %v2139
    %v2148 = vunpack.c.l.b16 %v2140
    %v2149 = vpack.c.b16 %v2146, %v2145
    %v2150 = vpack.c.b16 %v2148, %v2147
    %v2152 = vsel %vm121, %v2149, 0
    %v2155 = vsel %vm121, %v2150, 0
    %2157 = vmatprep.subr.bf16.mxu0 0
    %2158 = vmatpush1.bf16.msra.mxu0 0
    %2159 = vmatprep.subr.bf16.mxu0 0
    %2160 = vmatpush1.bf16.msra.mxu0 0
    %2161 = vmatprep.subr.bf16.mxu0 0
    %2162 = vmatpush1.bf16.msra.mxu0 0
    %2163 = vmatprep.subr.bf16.mxu0 0
    %2164 = vmatpush1.bf16.msra.mxu0 0
    %2165 = vmatprep.subr.bf16.mxu0 0
    %2166 = vmatpush1.bf16.msra.mxu0 0
    %2167 = vmatprep.subr.bf16.mxu0 0
    %2168 = vmatpush1.bf16.msra.mxu0 0
    %2169 = vmatprep.subr.bf16.mxu0 0
    %2170 = vmatpush1.bf16.msra.mxu0 %v961
    %2171 = vmatprep.subr.bf16.mxu0 0
    %2172 = vmatpush1.bf16.msra.mxu0 %v960
    %2173 = vmatprep.subr.bf16.mxu0 0
    %2174 = vmatpush2.bf16.msra.mxu0 0
    %2175 = vmatprep.subr.bf16.mxu0 0
    %2176 = vmatpush2.bf16.msra.mxu0 0
    %2177 = vmatprep.subr.bf16.mxu0 0
    %2178 = vmatpush2.bf16.msra.mxu0 0
    %2179 = vmatprep.subr.bf16.mxu0 0
    %2180 = vmatpush2.bf16.msra.mxu0 0
    %2181 = vmatprep.subr.bf16.mxu0 0
    %2182 = vmatpush2.bf16.msra.mxu0 0
    %2183 = vmatprep.subr.bf16.mxu0 0
    %2184 = vmatpush2.bf16.msra.mxu0 0
    %2185 = vmatprep.subr.bf16.mxu0 0
    %2186 = vmatpush2.bf16.msra.mxu0 0
    %2187 = vmatprep.subr.bf16.mxu0 0
    %2188 = vmatpush2.bf16.msra.mxu0 0
    %2189 = vmatprep.mubr.bf16.mxu0 0
    %2190 = vmatmul.mubr.bf16.gmra.mxu0 %v2152
    %v2191 = vpop.f32.mrf.mxu0
    %v2192 = vadd.f32 0.0, %v2191
    %v2193 = vpop.f32.mrf.mxu0
    %v2194 = vpop.f32.mrf.mxu0
    %v2195 = vadd.f32 0.0, %v2194
    %v2196 = vpop.f32.mrf.mxu0
    %2197 = vmatprep.mubr.bf16.mxu0 0
    %2198 = vmatmul.mubr.bf16.gmra.mxu0 %v2155
    %v2199 = vpop.f32.mrf.mxu0
    %v2200 = vadd.f32 0.0, %v2199
    %v2201 = vpop.f32.mrf.mxu0
    %v2202 = vpop.f32.mrf.mxu0
    %v2203 = vadd.f32 0.0, %v2202
    %v2204 = vpop.f32.mrf.mxu0
    %2205 = vdwg.mxu0
    %v2206 = vpack.c.bf16 %v2195, %v2192
    %v2207 = vpack.c.bf16 %v2203, %v2200
    %s2208 = scalar_lea.vmem [#allocation8], 128
    %v2209 = vld [vmem:[%s2208] sm:$0xf]
    %v2210 = vld [vmem:[%s2208 + $0x4] sm:$0xf]
    %v2211 = vld [vmem:[%s2208 + $0x8] sm:$0xf]
    %v2212 = vld [vmem:[%s2208 + $0xc] sm:$0xf]
    %v2217 = vunpack.c.l.b16 %v2209
    %v2218 = vunpack.c.l.b16 %v2210
    %v2219 = vunpack.c.l.b16 %v2211
    %v2220 = vunpack.c.l.b16 %v2212
    %v2221 = vpack.c.b16 %v2218, %v2217
    %v2222 = vpack.c.b16 %v2220, %v2219
    %v2226 = vsel %vm121, %v2206, 0
    %v2229 = vsel %vm121, %v2207, 0
    %2231 = vmatprep.subr.bf16.mxu0 0
    %2232 = vmatpush1.bf16.msra.mxu0 0
    %2233 = vmatprep.subr.bf16.mxu0 0
    %2234 = vmatpush1.bf16.msra.mxu0 0
    %2235 = vmatprep.subr.bf16.mxu0 0
    %2236 = vmatpush1.bf16.msra.mxu0 0
    %2237 = vmatprep.subr.bf16.mxu0 0
    %2238 = vmatpush1.bf16.msra.mxu0 0
    %2239 = vmatprep.subr.bf16.mxu0 0
    %2240 = vmatpush1.bf16.msra.mxu0 0
    %2241 = vmatprep.subr.bf16.mxu0 0
    %2242 = vmatpush1.bf16.msra.mxu0 0
    %2243 = vmatprep.subr.bf16.mxu0 0
    %2244 = vmatpush1.bf16.msra.mxu0 %v2222
    %2245 = vmatprep.subr.bf16.mxu0 0
    %2246 = vmatpush1.bf16.msra.mxu0 %v2221
    %2247 = vmatprep.subr.bf16.mxu0 0
    %2248 = vmatpush2.bf16.msra.mxu0 0
    %2249 = vmatprep.subr.bf16.mxu0 0
    %2250 = vmatpush2.bf16.msra.mxu0 0
    %2251 = vmatprep.subr.bf16.mxu0 0
    %2252 = vmatpush2.bf16.msra.mxu0 0
    %2253 = vmatprep.subr.bf16.mxu0 0
    %2254 = vmatpush2.bf16.msra.mxu0 0
    %2255 = vmatprep.subr.bf16.mxu0 0
    %2256 = vmatpush2.bf16.msra.mxu0 0
    %2257 = vmatprep.subr.bf16.mxu0 0
    %2258 = vmatpush2.bf16.msra.mxu0 0
    %2259 = vmatprep.subr.bf16.mxu0 0
    %2260 = vmatpush2.bf16.msra.mxu0 0
    %2261 = vmatprep.subr.bf16.mxu0 0
    %2262 = vmatpush2.bf16.msra.mxu0 0
    %2263 = vmatprep.mubr.bf16.mxu0 0
    %2264 = vmatmul.mubr.bf16.gmra.mxu0 %v2226
    %v2265 = vpop.f32.mrf.mxu0
    %v2266 = vadd.f32 0.0, %v2265
    %v2267 = vpop.f32.mrf.mxu0
    %v2268 = vpop.f32.mrf.mxu0
    %v2269 = vadd.f32 0.0, %v2268
    %v2270 = vpop.f32.mrf.mxu0
    %2271 = vmatprep.mubr.bf16.mxu0 0
    %2272 = vmatmul.mubr.bf16.gmra.mxu0 %v2229
    %v2273 = vpop.f32.mrf.mxu0
    %v2274 = vadd.f32 0.0, %v2273
    %v2275 = vpop.f32.mrf.mxu0
    %v2276 = vpop.f32.mrf.mxu0
    %v2277 = vadd.f32 0.0, %v2276
    %v2278 = vpop.f32.mrf.mxu0
    %2279 = vdwg.mxu0
    %v2280 = vadd.f32 %v2132, %v2266
    %v2281 = vadd.f32 %v2133, %v2269
    %v2282 = vadd.f32 %v2134, %v2274
    %v2283 = vadd.f32 %v2135, %v2277
    %v2284 = vld [vmem:[%s12] sm:$0x1]
    %v2286 = vlaneseq
    %v2287 = vshrl.u32 %v2286, 7
    %v2288 = vsub.s32 0, %v2287
    %v2289 = vrot.slane %v2284, %v2288
    %v2291 = vadd.f32 %v2280, %v2289
    %v2292 = vadd.f32 %v2281, %v2289
    %v2293 = vadd.f32 %v2282, %v2289
    %v2294 = vadd.f32 %v2283, %v2289
    %v2295 = vmul.f32 %v2291, 0.5
    %v2296 = vmul.f32 %v2292, 0.5
    %v2297 = vmul.f32 %v2293, 0.5
    %v2298 = vmul.f32 %v2294, 0.5
    %v2299 = vmul.f32 %v2291, 0.044715
    %v2300 = vmul.f32 %v2292, 0.044715
    %v2301 = vmul.f32 %v2293, 0.044715
    %v2302 = vmul.f32 %v2294, 0.044715
    %v2303 = vmul.f32 %v2299, %v2291
    %v2304 = vmul.f32 %v2300, %v2292
    %v2305 = vmul.f32 %v2301, %v2293
    %v2306 = vmul.f32 %v2302, %v2294
    %v2307 = vmul.f32 %v2303, %v2291
    %v2308 = vmul.f32 %v2304, %v2292
    %v2309 = vmul.f32 %v2305, %v2293
    %v2310 = vmul.f32 %v2306, %v2294
    %v2311 = vadd.f32 %v2291, %v2307
    %v2312 = vadd.f32 %v2292, %v2308
    %v2313 = vadd.f32 %v2293, %v2309
    %v2314 = vadd.f32 %v2294, %v2310
    %v2315 = vmul.f32 %v2311, 0.7978846
    %v2316 = vmul.f32 %v2312, 0.7978846
    %v2317 = vmul.f32 %v2313, 0.7978846
    %v2318 = vmul.f32 %v2314, 0.7978846
    %v2319 = vtanh.pop %v2315
    %v2320 = vtanh.pop %v2316
    %v2321 = vtanh.pop %v2317
    %v2322 = vtanh.pop %v2318
    %v2323 = vadd.f32 %v2319, 1.0
    %v2324 = vadd.f32 %v2320, 1.0
    %v2325 = vadd.f32 %v2321, 1.0
    %v2326 = vadd.f32 %v2322, 1.0
    %v2327 = vmul.f32 %v2295, %v2323
    %v2328 = vmul.f32 %v2296, %v2324
    %v2329 = vmul.f32 %v2297, %v2325
    %v2330 = vmul.f32 %v2298, %v2326
    %v2331 = vpack.c.bf16 %v2328, %v2327
    %v2332 = vpack.c.bf16 %v2330, %v2329
    %v2333 = vld [vmem:[%s13] sm:$0xf]
    %v2334 = vld [vmem:[%s13 + $0x4] sm:$0xf]
    %v2335 = vld [vmem:[%s13 + $0x8] sm:$0xf]
    %v2336 = vld [vmem:[%s13 + $0xc] sm:$0xf]
    %v2337 = vld [vmem:[%s13 + $0x10] sm:$0xf]
    %v2338 = vld [vmem:[%s13 + $0x14] sm:$0xf]
    %v2339 = vld [vmem:[%s13 + $0x18] sm:$0xf]
    %v2340 = vld [vmem:[%s13 + $0x1c] sm:$0xf]
    %v2341 = vld [vmem:[%s13 + $0x20] sm:$0xf]
    %v2342 = vld [vmem:[%s13 + $0x24] sm:$0xf]
    %v2343 = vld [vmem:[%s13 + $0x28] sm:$0xf]
    %v2344 = vld [vmem:[%s13 + $0x2c] sm:$0xf]
    %v2345 = vld [vmem:[%s13 + $0x30] sm:$0xf]
    %v2346 = vld [vmem:[%s13 + $0x34] sm:$0xf]
    %v2347 = vld [vmem:[%s13 + $0x38] sm:$0xf]
    %v2348 = vld [vmem:[%s13 + $0x3c] sm:$0xf]
    %v2349 = vld [vmem:[%s14] sm:$0x1]
    %v2351 = vlaneseq
    %v2352 = vshrl.u32 %v2351, 7
    %v2353 = vsub.s32 0, %v2352
    %v2354 = vrot.slane %v2349, %v2353
    %v2372 = vunpack.c.l.b16 %v2333
    %v2373 = vunpack.c.l.b16 %v2334
    %v2374 = vunpack.c.l.b16 %v2335
    %v2375 = vunpack.c.l.b16 %v2336
    %v2376 = vunpack.c.l.b16 %v2337
    %v2377 = vunpack.c.l.b16 %v2338
    %v2378 = vunpack.c.l.b16 %v2339
    %v2379 = vunpack.c.l.b16 %v2340
    %v2380 = vunpack.c.l.b16 %v2341
    %v2381 = vunpack.c.l.b16 %v2342
    %v2382 = vunpack.c.l.b16 %v2343
    %v2383 = vunpack.c.l.b16 %v2344
    %v2384 = vunpack.c.l.b16 %v2345
    %v2385 = vunpack.c.l.b16 %v2346
    %v2386 = vunpack.c.l.b16 %v2347
    %v2387 = vunpack.c.l.b16 %v2348
    %v2388 = vpack.c.b16 %v2373, %v2372
    %v2389 = vpack.c.b16 %v2375, %v2374
    %v2390 = vpack.c.b16 %v2377, %v2376
    %v2391 = vpack.c.b16 %v2379, %v2378
    %v2392 = vpack.c.b16 %v2381, %v2380
    %v2393 = vpack.c.b16 %v2383, %v2382
    %v2394 = vpack.c.b16 %v2385, %v2384
    %v2395 = vpack.c.b16 %v2387, %v2386
    %2404 = vmatprep.subr.bf16.mxu0 0
    %2405 = vmatpush1.bf16.msra.mxu0 %v2395
    %2406 = vmatprep.subr.bf16.mxu0 0
    %2407 = vmatpush1.bf16.msra.mxu0 %v2394
    %2408 = vmatprep.subr.bf16.mxu0 0
    %2409 = vmatpush1.bf16.msra.mxu0 %v2393
    %2410 = vmatprep.subr.bf16.mxu0 0
    %2411 = vmatpush1.bf16.msra.mxu0 %v2392
    %2412 = vmatprep.subr.bf16.mxu0 0
    %2413 = vmatpush1.bf16.msra.mxu0 %v2391
    %2414 = vmatprep.subr.bf16.mxu0 0
    %2415 = vmatpush1.bf16.msra.mxu0 %v2390
    %2416 = vmatprep.subr.bf16.mxu0 0
    %2417 = vmatpush1.bf16.msra.mxu0 %v2389
    %2418 = vmatprep.subr.bf16.mxu0 0
    %2419 = vmatpush1.bf16.msra.mxu0 %v2388
    %2420 = vmatprep.subr.bf16.mxu0 0
    %2421 = vmatpush2.bf16.msra.mxu0 0
    %2422 = vmatprep.subr.bf16.mxu0 0
    %2423 = vmatpush2.bf16.msra.mxu0 0
    %2424 = vmatprep.subr.bf16.mxu0 0
    %2425 = vmatpush2.bf16.msra.mxu0 0
    %2426 = vmatprep.subr.bf16.mxu0 0
    %2427 = vmatpush2.bf16.msra.mxu0 0
    %2428 = vmatprep.subr.bf16.mxu0 0
    %2429 = vmatpush2.bf16.msra.mxu0 0
    %2430 = vmatprep.subr.bf16.mxu0 0
    %2431 = vmatpush2.bf16.msra.mxu0 0
    %2432 = vmatprep.subr.bf16.mxu0 0
    %2433 = vmatpush2.bf16.msra.mxu0 0
    %2434 = vmatprep.subr.bf16.mxu0 0
    %2435 = vmatpush2.bf16.msra.mxu0 0
    %2436 = vmatprep.mubr.bf16.mxu0 0
    %2437 = vmatmul.mubr.bf16.gmra.mxu0 %v2331
    %v2438 = vpop.f32.mrf.mxu0
    %v2439 = vadd.f32 %v2354, %v2438
    %v2440 = vpop.f32.mrf.mxu0
    %v2441 = vpop.f32.mrf.mxu0
    %v2442 = vadd.f32 %v2354, %v2441
    %v2443 = vpop.f32.mrf.mxu0
    %2444 = vmatprep.mubr.bf16.mxu0 0
    %2445 = vmatmul.mubr.bf16.gmra.mxu0 %v2332
    %v2446 = vpop.f32.mrf.mxu0
    %v2447 = vadd.f32 %v2354, %v2446
    %v2448 = vpop.f32.mrf.mxu0
    %v2449 = vpop.f32.mrf.mxu0
    %v2450 = vadd.f32 %v2354, %v2449
    %v2451 = vpop.f32.mrf.mxu0
    %2452 = vdwg.mxu0
    %v2453 = vadd.f32 %v882, %v2439
    %v2454 = vadd.f32 %v883, %v2442
    %v2455 = vadd.f32 %v884, %v2447
    %v2456 = vadd.f32 %v885, %v2450
    %v2457 = vmul.f32 %v2453, %v865
    %v2458 = vmul.f32 %v2454, %v870
    %v2459 = vmul.f32 %v2455, %v875
    %v2460 = vmul.f32 %v2456, %v880
    %2461 = vst.msk [vmem:[#allocation10] sm:$0xff] %vm121, %v2457
    %2462 = vst.msk [vmem:[#allocation10 + $0x8] sm:$0xff] %vm121, %v2458
    %2463 = vst.msk [vmem:[#allocation10 + $0x10] sm:$0xff] %vm121, %v2459
    %2464 = vst.msk [vmem:[#allocation10 + $0x18] sm:$0xff] %vm121, %v2460
    // Predicated region
    $region78: #{tpu_custom_call.1} parent=1 // pred_check
      _
    $region79: #{tpu_custom_call.1} parent=1 // pred_check_branch
      %2466 = sbr.rel (0) target = $region81
    $region80: #{tpu_custom_call.1} parent=1 // pred_region
      %s2468 = ssub.s32 512, 512
      %2469 = vsyncadd [#allocation4], %s2468
      %s2470 = sshll.u32 [#allocation10], 4
      %s2471 = int_to_ptr.vmem [resolvable:$true] %s2470
      %2476 = dma.vmem_to_hbm [thread:$0]  %s2471, 512, %s15, [#allocation4], 128, 128, 8
    $region81: #{tpu_custom_call.1} parent=1 // pred_fallthru
      _
    // Predicated region
    $region82: #{tpu_custom_call.1} parent=1 // pred_check
      _
    $region83: #{tpu_custom_call.1} parent=1 // pred_check_branch
      %2478 = sbr.rel (0) target = $region85
    $region84: #{tpu_custom_call.1} parent=1 // pred_region
      %2479 = dma.done [#allocation4], 512
    $region85: #{tpu_custom_call.1} parent=1 // pred_fallthru
      _
    %2480 = vsyncpa [#allocation3], 1
    %2481 = vsyncpa [#allocation6], 1
    %2482 = vsyncpa [#allocation9], 1
    %2483 = vsyncpa [#allocation4], 1

</llo_original>
